<compile_context>
chip_gen: v7x
topology: tpu7x:2x2x1
jax: 0.10.0
libtpu: 0.0.40
codegen_flags: <defaults>
</compile_context>

<pallas_src>
import functools

import jax
import jax.numpy as jnp
from jax import lax
from jax.experimental import pallas as pl
from jax.experimental.pallas import tpu as pltpu

BN_EPS = 1e-3
LANE = 128
OUT_C = 192          # every InceptionC branch ends with 192 channels


def _ru(a, b):
    return (a + b - 1) // b * b


# ----------------------------------------------------------------------------
# Pallas kernels
# ----------------------------------------------------------------------------
def _gemm_bias_relu_kernel(x_ref, w_ref, b_ref, o_ref):
    """relu((tm,K)@(K,P) + bias).  BN scale is pre-folded into w."""
    acc = jnp.dot(x_ref[...], w_ref[...], preferred_element_type=jnp.float32)
    o_ref[...] = jnp.maximum(acc + b_ref[...], 0.0).astype(o_ref.dtype)


def _tap_gemm_kernel(x_ref, w_ref, b_ref, o_ref, acc_ref, *, ntaps):
    """One tap of a 7-tap (1x7 / 7x1) conv as a GEMM, accumulated over the
    reduction grid axis t into a f32 VMEM scratch; bias+ReLU on the last tap."""
    t = pl.program_id(1)

    @pl.when(t == 0)
    def _init():
        acc_ref[...] = jnp.zeros_like(acc_ref)

    acc_ref[...] += jnp.dot(x_ref[...], w_ref[...],
                            preferred_element_type=jnp.float32)

    @pl.when(t == ntaps - 1)
    def _finalize():
        o_ref[...] = jnp.maximum(acc_ref[...] + b_ref[...],
                                 0.0).astype(o_ref.dtype)


# ----------------------------------------------------------------------------
# Kernel wrappers
# ----------------------------------------------------------------------------
def gemm_bias_relu(x2d, w, b, out_dtype=jnp.float32, tm_max=512):
    """Fused 1x1-conv GEMM: relu(x2d @ w + b).  x2d/w bf16, b f32."""
    M, K = x2d.shape
    Kw, P = w.shape
    assert K == Kw
    tm = min(tm_max, _ru(M, 16))
    Mp = _ru(M, tm)
    if Mp != M:
        x2d = jnp.pad(x2d, ((0, Mp - M), (0, 0)))
    out = pl.pallas_call(
        _gemm_bias_relu_kernel,
        out_shape=jax.ShapeDtypeStruct((Mp, P), out_dtype),
        grid_spec=pltpu.PrefetchScalarGridSpec(
            num_scalar_prefetch=0,
            grid=(Mp // tm,),
            in_specs=[
                pl.BlockSpec((tm, K), lambda i: (i, 0)),
                pl.BlockSpec((K, P), lambda i: (0, 0)),   # resident weights
                pl.BlockSpec((1, P), lambda i: (0, 0)),   # resident bias
            ],
            out_specs=pl.BlockSpec((tm, P), lambda i: (i, 0)),
        ),
        compiler_params=pltpu.CompilerParams(
            dimension_semantics=("parallel",)),
    )(x2d, w, b)
    return out[:M] if Mp != M else out


def conv7_bias_relu(x_nhwc, w_taps, b, axis, out_dtype=jnp.bfloat16):
    """Factorized 7-tap conv (1x7 if axis==2, 7x1 if axis==1), stride 1, pad 3,
    fused with folded-BN bias + ReLU.  Channels already lane-padded.

    The conv axis is moved to the front and flattened with the remaining
    spatial*batch rows, so each tap t is just a row-shifted (Rp, C) block of
    the same padded 2-D array — selected purely by the BlockSpec index_map
    (no im2col materialization in HBM)."""
    N, H, W, C = x_nhwc.shape
    ntaps = 7
    pout = w_taps.shape[1]
    if axis == 2:                                   # 1x7: conv along W
        xt = jnp.transpose(x_nhwc, (2, 0, 1, 3))    # (W, N, H, C)
    else:                                           # 7x1: conv along H
        xt = jnp.transpose(x_nhwc, (1, 0, 2, 3))    # (H, N, W, C)
    L, A, B2 = xt.shape[0], xt.shape[1], xt.shape[2]
    R = A * B2
    Rp = _ru(R, 16)
    xt = xt.reshape(L, R, C)
    xt = jnp.pad(xt, ((3, 3), (0, Rp - R), (0, 0)))     # pad conv axis + rows
    x2 = xt.reshape((L + 6) * Rp, C)

    out = pl.pallas_call(
        functools.partial(_tap_gemm_kernel, ntaps=ntaps),
        out_shape=jax.ShapeDtypeStruct((L * Rp, pout), out_dtype),
        grid_spec=pltpu.PrefetchScalarGridSpec(
            num_scalar_prefetch=0,
            grid=(L, ntaps),
            in_specs=[
                pl.BlockSpec((Rp, C), lambda i, t: (i + t, 0)),   # shifted rows
                pl.BlockSpec((C, pout), lambda i, t: (t, 0)),     # tap weights
                pl.BlockSpec((1, pout), lambda i, t: (0, 0)),     # bias
            ],
            out_specs=pl.BlockSpec((Rp, pout), lambda i, t: (i, 0)),
            scratch_shapes=[pltpu.VMEM((Rp, pout), jnp.float32)],
        ),
        compiler_params=pltpu.CompilerParams(
            dimension_semantics=("parallel", "arbitrary")),
    )(x2, w_taps, b)

    out = out.reshape(L, Rp, pout)[:, :R, :].reshape(L, A, B2, pout)
    if axis == 2:
        return jnp.transpose(out, (1, 2, 0, 3))     # (N, H, W, pout)
    return jnp.transpose(out, (1, 0, 2, 3))         # (N, H, W, pout)


# ----------------------------------------------------------------------------
# Parameter construction (synthetic, deterministic) + kernel-ready prep
# ----------------------------------------------------------------------------
def make_basic_conv(key, cin, cout, kh, kw):
    kw_, kg, kb, km, kv = jax.random.split(key, 5)
    w = 0.1 * jax.random.normal(kw_, (cout, cin, kh, kw), jnp.float32)
    gamma = 1.0 + 0.1 * jax.random.normal(kg, (cout,), jnp.float32)
    beta = 0.1 * jax.random.normal(kb, (cout,), jnp.float32)
    mean = 0.1 * jax.random.normal(km, (cout,), jnp.float32)
    var = 1.0 + 0.1 * jax.random.uniform(kv, (cout,), jnp.float32)
    scale = gamma / jnp.sqrt(var + BN_EPS)
    bias = beta - mean * scale
    return {"w": w, "scale": scale, "bias": bias, "k": (kh, kw)}


def make_inception_c_params(key, in_channels, channels_7x7):
    c7 = channels_7x7
    keys = jax.random.split(key, 10)
    return {
        "branch1x1":      make_basic_conv(keys[0], in_channels, OUT_C, 1, 1),
        "branch7x7_1":    make_basic_conv(keys[1], in_channels, c7, 1, 1),
        "branch7x7_2":    make_basic_conv(keys[2], c7, c7, 1, 7),
        "branch7x7_3":    make_basic_conv(keys[3], c7, OUT_C, 7, 1),
        "branch7x7dbl_1": make_basic_conv(keys[4], in_channels, c7, 1, 1),
        "branch7x7dbl_2": make_basic_conv(keys[5], c7, c7, 7, 1),
        "branch7x7dbl_3": make_basic_conv(keys[6], c7, c7, 1, 7),
        "branch7x7dbl_4": make_basic_conv(keys[7], c7, c7, 7, 1),
        "branch7x7dbl_5": make_basic_conv(keys[8], c7, OUT_C, 1, 7),
        "branch_pool":    make_basic_conv(keys[9], in_channels, OUT_C, 1, 1),
    }


def _fold_pad_weights(p, cin_pad, cout_pad):
    """PyTorch [Cout,Cin,KH,KW] -> (taps*cin_pad, cout_pad) bf16 with BN scale
    folded in and zero padding on both channel axes; bias -> (1, cout_pad) f32."""
    w = p["w"]
    cout, cin, kh, kw = w.shape
    taps = kh * kw
    wf = jnp.transpose(w, (2, 3, 1, 0)).reshape(taps, cin, cout)
    wf = wf * p["scale"].reshape(1, 1, cout)
    wf = jnp.pad(wf, ((0, 0), (0, cin_pad - cin), (0, cout_pad - cout)))
    wf = wf.reshape(taps * cin_pad, cout_pad).astype(jnp.bfloat16)
    b = jnp.pad(p["bias"].reshape(1, cout), ((0, 0), (0, cout_pad - cout)))
    return wf, b.astype(jnp.float32)


def prepare_inception_c(params, in_channels, c7):
    """One-time (offline) weight prep: fold BN, pad channels, cast bf16."""
    cp = _ru(c7, LANE)          # padded c7 width
    co = _ru(OUT_C, LANE)       # padded 192 width (256)
    prep = {}
    # fused 1x1 over x: [branch1x1 | branch7x7_1 | branch7x7dbl_1]
    w_b1, b_b1 = _fold_pad_weights(params["branch1x1"], in_channels, co)
    w_71, b_71 = _fold_pad_weights(params["branch7x7_1"], in_channels, cp)
    w_d1, b_d1 = _fold_pad_weights(params["branch7x7dbl_1"], in_channels, cp)
    prep["fused1x1_w"] = jnp.concatenate([w_b1, w_71, w_d1], axis=1)
    prep["fused1x1_b"] = jnp.concatenate([b_b1, b_71, b_d1], axis=1)
    # 7-tap chains (inputs arrive channel-padded to cp)
    prep["b7_2_w"], prep["b7_2_b"] = _fold_pad_weights(params["branch7x7_2"], cp, cp)
    prep["b7_3_w"], prep["b7_3_b"] = _fold_pad_weights(params["branch7x7_3"], cp, co)
    prep["dbl_2_w"], prep["dbl_2_b"] = _fold_pad_weights(params["branch7x7dbl_2"], cp, cp)
    prep["dbl_3_w"], prep["dbl_3_b"] = _fold_pad_weights(params["branch7x7dbl_3"], cp, cp)
    prep["dbl_4_w"], prep["dbl_4_b"] = _fold_pad_weights(params["branch7x7dbl_4"], cp, cp)
    prep["dbl_5_w"], prep["dbl_5_b"] = _fold_pad_weights(params["branch7x7dbl_5"], cp, co)
    # pool branch 1x1 (true 1x1 on the pooled input — no 3x3 tiling trick)
    prep["pool_w"], prep["pool_b"] = _fold_pad_weights(params["branch_pool"], in_channels, co)
    return prep


# ----------------------------------------------------------------------------
# InceptionC forward (Pallas path)
# ----------------------------------------------------------------------------
def inception_c(x_nchw, prep):
    N, Cin, H, W = x_nchw.shape
    M = N * H * W
    c7p = prep["b7_2_w"].shape[1]                     # padded c7 width (static)
    co192 = prep["fused1x1_w"].shape[1] - 2 * c7p     # padded 192 width (static)

    x = jnp.transpose(x_nchw, (0, 2, 3, 1))           # NCHW -> NHWC, f32
    x2 = x.reshape(M, Cin).astype(jnp.bfloat16)

    # --- three 1x1 convs on x fused into one lane-dense GEMM ---------------
    fused = gemm_bias_relu(x2, prep["fused1x1_w"], prep["fused1x1_b"],
                           out_dtype=jnp.float32)
    b1 = fused[:, :OUT_C].reshape(N, H, W, OUT_C)
    t7 = fused[:, co192:co192 + c7p].astype(jnp.bfloat16).reshape(N, H, W, c7p)
    td = fused[:, co192 + c7p:co192 + 2 * c7p].astype(jnp.bfloat16).reshape(N, H, W, c7p)

    # --- branch7x7: 1x7 -> 7x1 ---------------------------------------------
    t7 = conv7_bias_relu(t7, prep["b7_2_w"], prep["b7_2_b"], axis=2,
                         out_dtype=jnp.bfloat16)
    b7 = conv7_bias_relu(t7, prep["b7_3_w"], prep["b7_3_b"], axis=1,
                         out_dtype=jnp.float32)[..., :OUT_C]

    # --- branch7x7dbl: 7x1 -> 1x7 -> 7x1 -> 1x7 -----------------------------
    td = conv7_bias_relu(td, prep["dbl_2_w"], prep["dbl_2_b"], axis=1,
                         out_dtype=jnp.bfloat16)
    td = conv7_bias_relu(td, prep["dbl_3_w"], prep["dbl_3_b"], axis=2,
                         out_dtype=jnp.bfloat16)
    td = conv7_bias_relu(td, prep["dbl_4_w"], prep["dbl_4_b"], axis=1,
                         out_dtype=jnp.bfloat16)
    bd = conv7_bias_relu(td, prep["dbl_5_w"], prep["dbl_5_b"], axis=2,
                         out_dtype=jnp.float32)[..., :OUT_C]

    # --- branch_pool: 3x3 avg pool (VPU, plain JAX) + true 1x1 GEMM ---------
    pooled = lax.reduce_window(x, 0.0, lax.add, (1, 3, 3, 1), (1, 1, 1, 1),
                               [(0, 0), (1, 1), (1, 1), (0, 0)]) / 9.0
    bp = gemm_bias_relu(pooled.reshape(M, Cin).astype(jnp.bfloat16),
                        prep["pool_w"], prep["pool_b"],
                        out_dtype=jnp.float32)[:, :OUT_C].reshape(N, H, W, OUT_C)

    out = jnp.concatenate([b1, b7, bd, bp], axis=-1)  # channel concat
    return jnp.transpose(out, (0, 3, 1, 2))           # NHWC -> NCHW


# ----------------------------------------------------------------------------
# Pure-JAX f32 reference (mirrors the PyTorch forward) for a sanity check
# ----------------------------------------------------------------------------
def ref_basic_conv(x_nchw, p):
    kh, kw = p["k"]
    ph, pw = (kh - 1) // 2, (kw - 1) // 2
    y = lax.conv_general_dilated(
        x_nchw, p["w"], window_strides=(1, 1), padding=[(ph, ph), (pw, pw)],
        dimension_numbers=("NCHW", "OIHW", "NCHW"))
    s = p["scale"].reshape(1, -1, 1, 1)
    b = p["bias"].reshape(1, -1, 1, 1)
    return jnp.maximum(y * s + b, 0.0)


def ref_inception_c(x, params):
    b1 = ref_basic_conv(x, params["branch1x1"])
    b7 = ref_basic_conv(x, params["branch7x7_1"])
    b7 = ref_basic_conv(b7, params["branch7x7_2"])
    b7 = ref_basic_conv(b7, params["branch7x7_3"])
    d = ref_basic_conv(x, params["branch7x7dbl_1"])
    d = ref_basic_conv(d, params["branch7x7dbl_2"])
    d = ref_basic_conv(d, params["branch7x7dbl_3"])
    d = ref_basic_conv(d, params["branch7x7dbl_4"])
    d = ref_basic_conv(d, params["branch7x7dbl_5"])
    pooled = lax.reduce_window(x, 0.0, lax.add, (1, 1, 3, 3), (1, 1, 1, 1),
                               [(0, 0), (0, 0), (1, 1), (1, 1)]) / 9.0
    bp = ref_basic_conv(pooled, params["branch_pool"])
    return jnp.concatenate([b1, b7, d, bp], axis=1)


# ----------------------------------------------------------------------------
if __name__ == "__main__":
    N, C_IN, H, W = 2, 16, 8, 8      # small shapes; M = N*H*W = 128
    C7 = 8

    key = jax.random.PRNGKey(0)
    kx, kp = jax.random.split(key)
    x = jax.random.normal(kx, (N, C_IN, H, W), jnp.float32)
    params = make_inception_c_params(kp, C_IN, C7)
    prepared = prepare_inception_c(params, C_IN, C7)

    fwd = jax.jit(lambda a: inception_c(a, prepared))
    out = jax.block_until_ready(fwd(x))
    assert out.shape == (N, OUT_C * 4, H, W), out.shape

    ref = jax.block_until_ready(ref_inception_c(x, params))
    max_err = float(jnp.max(jnp.abs(out - ref)))
    assert jnp.allclose(out, ref, atol=3e-2, rtol=3e-2), max_err

    print("KERNEL_OK")
</pallas_src>

<mosaic_0001>
module attributes {stable_mosaic.version = 11 : i64} {
  func.func @_gemm_bias_relu_kernel(%arg0: i32, %arg1: memref<128x16xbf16, #tpu.memory_space<vmem>>, %arg2: memref<16x512xbf16, #tpu.memory_space<vmem>>, %arg3: memref<1x512xf32, #tpu.memory_space<vmem>>, %arg4: memref<128x512xf32, #tpu.memory_space<vmem>>) attributes {dimension_semantics = [#tpu.dimension_semantics<parallel>], iteration_bounds = array<i64: 1>, scalar_prefetch = 0 : i64, scratch_operands = 0 : i64, tpu.core_type = #tpu.core_type<tc>, window_params = [{transform_indices = @transform_0, window_bounds = array<i64: 128, 16>}, {pipeline_mode = #tpu.pipeline_mode<synchronous>, transform_indices = @transform_1, window_bounds = array<i64: 16, 512>}, {pipeline_mode = #tpu.pipeline_mode<synchronous>, transform_indices = @transform_2, window_bounds = array<i64: 1, 512>}, {transform_indices = @transform_3, window_bounds = array<i64: 128, 512>}]} {
    %c0 = arith.constant 0 : index
    %c0_0 = arith.constant 0 : index
    %0 = vector.load %arg1[%c0, %c0_0] : memref<128x16xbf16, #tpu.memory_space<vmem>>, vector<128x16xbf16>
    %c0_1 = arith.constant 0 : index
    %c0_2 = arith.constant 0 : index
    %1 = vector.load %arg2[%c0_1, %c0_2] : memref<16x512xbf16, #tpu.memory_space<vmem>>, vector<16x512xbf16>
    %cst = arith.constant dense<0.000000e+00> : vector<128x512xf32>
    %2 = tpu.matmul %0, %1, %cst {dimension_numbers = #tpu.dot_dimension_numbers<[1], [0], [0], [1], [0, 0, 1, 1], [], []>} : vector<128x16xbf16>, vector<16x512xbf16>, vector<128x512xf32> -> vector<128x512xf32>
    %c0_3 = arith.constant 0 : index
    %c0_4 = arith.constant 0 : index
    %3 = vector.load %arg3[%c0_3, %c0_4] : memref<1x512xf32, #tpu.memory_space<vmem>>, vector<1x512xf32>
    %4 = vector.broadcast %3 : vector<1x512xf32> to vector<128x512xf32>
    %5 = arith.addf %2, %4 : vector<128x512xf32>
    %cst_5 = arith.constant 0.000000e+00 : f32
    %6 = vector.broadcast %cst_5 : f32 to vector<128x512xf32>
    %7 = arith.maximumf %5, %6 : vector<128x512xf32>
    %c0_6 = arith.constant 0 : index
    %c0_7 = arith.constant 0 : index
    %8 = vector.load %arg4[%c0_6, %c0_7] : memref<128x512xf32, #tpu.memory_space<vmem>>, vector<128x512xf32>
    tpu.vector_store %arg4[%c0_6, %c0_7], %7 {strides = array<i32>} : memref<128x512xf32, #tpu.memory_space<vmem>>, vector<128x512xf32>,
    return
  }
  func.func @transform_0(%arg0: i32) -> (i32, i32) {
    %c0_i32 = arith.constant 0 : i32
    %c0_i32_0 = arith.constant 0 : i32
    return %arg0, %c0_i32 : i32, i32
  }
  func.func @transform_1(%arg0: i32) -> (i32, i32) {
    %c0_i32 = arith.constant 0 : i32
    %c0_i32_0 = arith.constant 0 : i32
    %c0_i32_1 = arith.constant 0 : i32
    return %c0_i32, %c0_i32_0 : i32, i32
  }
  func.func @transform_2(%arg0: i32) -> (i32, i32) {
    %c0_i32 = arith.constant 0 : i32
    %c0_i32_0 = arith.constant 0 : i32
    %c0_i32_1 = arith.constant 0 : i32
    return %c0_i32, %c0_i32_0 : i32, i32
  }
  func.func @transform_3(%arg0: i32) -> (i32, i32) {
    %c0_i32 = arith.constant 0 : i32
    %c0_i32_0 = arith.constant 0 : i32
    return %arg0, %c0_i32 : i32, i32
  }
}

module attributes {stable_mosaic.version = 11 : i64} {
  func.func @_gemm_bias_relu_kernel(%arg0: i32, %arg1: memref<128x16xbf16, #tpu.memory_space<vmem>>, %arg2: memref<16x256xbf16, #tpu.memory_space<vmem>>, %arg3: memref<1x256xf32, #tpu.memory_space<vmem>>, %arg4: memref<128x256xf32, #tpu.memory_space<vmem>>) attributes {dimension_semantics = [#tpu.dimension_semantics<parallel>], iteration_bounds = array<i64: 1>, scalar_prefetch = 0 : i64, scratch_operands = 0 : i64, tpu.core_type = #tpu.core_type<tc>, window_params = [{transform_indices = @transform_0, window_bounds = array<i64: 128, 16>}, {pipeline_mode = #tpu.pipeline_mode<synchronous>, transform_indices = @transform_1, window_bounds = array<i64: 16, 256>}, {pipeline_mode = #tpu.pipeline_mode<synchronous>, transform_indices = @transform_2, window_bounds = array<i64: 1, 256>}, {transform_indices = @transform_3, window_bounds = array<i64: 128, 256>}]} {
    %c0 = arith.constant 0 : index
    %c0_0 = arith.constant 0 : index
    %0 = vector.load %arg1[%c0, %c0_0] : memref<128x16xbf16, #tpu.memory_space<vmem>>, vector<128x16xbf16>
    %c0_1 = arith.constant 0 : index
    %c0_2 = arith.constant 0 : index
    %1 = vector.load %arg2[%c0_1, %c0_2] : memref<16x256xbf16, #tpu.memory_space<vmem>>, vector<16x256xbf16>
    %cst = arith.constant dense<0.000000e+00> : vector<128x256xf32>
    %2 = tpu.matmul %0, %1, %cst {dimension_numbers = #tpu.dot_dimension_numbers<[1], [0], [0], [1], [0, 0, 1, 1], [], []>} : vector<128x16xbf16>, vector<16x256xbf16>, vector<128x256xf32> -> vector<128x256xf32>
    %c0_3 = arith.constant 0 : index
    %c0_4 = arith.constant 0 : index
    %3 = vector.load %arg3[%c0_3, %c0_4] : memref<1x256xf32, #tpu.memory_space<vmem>>, vector<1x256xf32>
    %4 = vector.broadcast %3 : vector<1x256xf32> to vector<128x256xf32>
    %5 = arith.addf %2, %4 : vector<128x256xf32>
    %cst_5 = arith.constant 0.000000e+00 : f32
    %6 = vector.broadcast %cst_5 : f32 to vector<128x256xf32>
    %7 = arith.maximumf %5, %6 : vector<128x256xf32>
    %c0_6 = arith.constant 0 : index
    %c0_7 = arith.constant 0 : index
    %8 = vector.load %arg4[%c0_6, %c0_7] : memref<128x256xf32, #tpu.memory_space<vmem>>, vector<128x256xf32>
    tpu.vector_store %arg4[%c0_6, %c0_7], %7 {strides = array<i32>} : memref<128x256xf32, #tpu.memory_space<vmem>>, vector<128x256xf32>,
    return
  }
  func.func @transform_0(%arg0: i32) -> (i32, i32) {
    %c0_i32 = arith.constant 0 : i32
    %c0_i32_0 = arith.constant 0 : i32
    return %arg0, %c0_i32 : i32, i32
  }
  func.func @transform_1(%arg0: i32) -> (i32, i32) {
    %c0_i32 = arith.constant 0 : i32
    %c0_i32_0 = arith.constant 0 : i32
    %c0_i32_1 = arith.constant 0 : i32
    return %c0_i32, %c0_i32_0 : i32, i32
  }
  func.func @transform_2(%arg0: i32) -> (i32, i32) {
    %c0_i32 = arith.constant 0 : i32
    %c0_i32_0 = arith.constant 0 : i32
    %c0_i32_1 = arith.constant 0 : i32
    return %c0_i32, %c0_i32_0 : i32, i32
  }
  func.func @transform_3(%arg0: i32) -> (i32, i32) {
    %c0_i32 = arith.constant 0 : i32
    %c0_i32_0 = arith.constant 0 : i32
    return %arg0, %c0_i32 : i32, i32
  }
}

module attributes {stable_mosaic.version = 11 : i64} {
  func.func @_tap_gemm_kernel(%arg0: i32, %arg1: i32, %arg2: memref<16x128xbf16, #tpu.memory_space<vmem>>, %arg3: memref<128x128xbf16, #tpu.memory_space<vmem>>, %arg4: memref<1x128xf32, #tpu.memory_space<vmem>>, %arg5: memref<16x128xbf16, #tpu.memory_space<vmem>>, %arg6: memref<16x128xf32, #tpu.memory_space<vmem>>) attributes {dimension_semantics = [#tpu.dimension_semantics<parallel>, #tpu.dimension_semantics<arbitrary>], iteration_bounds = array<i64: 8, 7>, scalar_prefetch = 0 : i64, scratch_operands = 1 : i64, tpu.core_type = #tpu.core_type<tc>, window_params = [{transform_indices = @transform_0, window_bounds = array<i64: 16, 128>}, {transform_indices = @transform_1, window_bounds = array<i64: 128, 128>}, {pipeline_mode = #tpu.pipeline_mode<synchronous>, transform_indices = @transform_2, window_bounds = array<i64: 1, 128>}, {transform_indices = @transform_3, window_bounds = array<i64: 16, 128>}]} {
    %c0_i32 = arith.constant 0 : i32
    %0 = arith.cmpi eq, %arg1, %c0_i32 : i32
    %1 = arith.extui %0 : i1 to i32
    %c0_i32_0 = arith.constant 0 : i32
    %2 = arith.cmpi ne, %1, %c0_i32_0 : i32
    scf.if %2 {
      %cst_9 = arith.constant 0.000000e+00 : f32
      %12 = vector.broadcast %cst_9 : f32 to vector<16x128xf32>
      %c0_10 = arith.constant 0 : index
      %c0_11 = arith.constant 0 : index
      %13 = vector.load %arg6[%c0_10, %c0_11] : memref<16x128xf32, #tpu.memory_space<vmem>>, vector<16x128xf32>
      tpu.vector_store %arg6[%c0_10, %c0_11], %12 {strides = array<i32>} : memref<16x128xf32, #tpu.memory_space<vmem>>, vector<16x128xf32>,
    } else {
    }
    %c0 = arith.constant 0 : index
    %c0_1 = arith.constant 0 : index
    %3 = vector.load %arg6[%c0, %c0_1] : memref<16x128xf32, #tpu.memory_space<vmem>>, vector<16x128xf32>
    %c0_2 = arith.constant 0 : index
    %c0_3 = arith.constant 0 : index
    %4 = vector.load %arg2[%c0_2, %c0_3] : memref<16x128xbf16, #tpu.memory_space<vmem>>, vector<16x128xbf16>
    %c0_4 = arith.constant 0 : index
    %c0_5 = arith.constant 0 : index
    %5 = vector.load %arg3[%c0_4, %c0_5] : memref<128x128xbf16, #tpu.memory_space<vmem>>, vector<128x128xbf16>
    %cst = arith.constant dense<0.000000e+00> : vector<16x128xf32>
    %6 = tpu.matmul %4, %5, %cst {dimension_numbers = #tpu.dot_dimension_numbers<[1], [0], [0], [1], [0, 0, 1, 1], [], []>} : vector<16x128xbf16>, vector<128x128xbf16>, vector<16x128xf32> -> vector<16x128xf32>
    %7 = arith.addf %3, %6 : vector<16x128xf32>
    %c0_6 = arith.constant 0 : index
    %c0_7 = arith.constant 0 : index
    %8 = vector.load %arg6[%c0_6, %c0_7] : memref<16x128xf32, #tpu.memory_space<vmem>>, vector<16x128xf32>
    tpu.vector_store %arg6[%c0_6, %c0_7], %7 {strides = array<i32>} : memref<16x128xf32, #tpu.memory_space<vmem>>, vector<16x128xf32>,
    %c6_i32 = arith.constant 6 : i32
    %9 = arith.cmpi eq, %arg1, %c6_i32 : i32
    %10 = arith.extui %9 : i1 to i32
    %c0_i32_8 = arith.constant 0 : i32
    %11 = arith.cmpi ne, %10, %c0_i32_8 : i32
    scf.if %11 {
      %c0_9 = arith.constant 0 : index
      %c0_10 = arith.constant 0 : index
      %12 = vector.load %arg6[%c0_9, %c0_10] : memref<16x128xf32, #tpu.memory_space<vmem>>, vector<16x128xf32>
      %c0_11 = arith.constant 0 : index
      %c0_12 = arith.constant 0 : index
      %13 = vector.load %arg4[%c0_11, %c0_12] : memref<1x128xf32, #tpu.memory_space<vmem>>, vector<1x128xf32>
      %14 = vector.broadcast %13 : vector<1x128xf32> to vector<16x128xf32>
      %15 = arith.addf %12, %14 : vector<16x128xf32>
      %cst_13 = arith.constant 0.000000e+00 : f32
      %16 = vector.broadcast %cst_13 : f32 to vector<16x128xf32>
      %17 = arith.maximumf %15, %16 : vector<16x128xf32>
      %18 = arith.truncf %17 : vector<16x128xf32> to vector<16x128xbf16>
      %c0_14 = arith.constant 0 : index
      %c0_15 = arith.constant 0 : index
      %19 = vector.load %arg5[%c0_14, %c0_15] : memref<16x128xbf16, #tpu.memory_space<vmem>>, vector<16x128xbf16>
      tpu.vector_store %arg5[%c0_14, %c0_15], %18 {strides = array<i32>} : memref<16x128xbf16, #tpu.memory_space<vmem>>, vector<16x128xbf16>,
    } else {
    }
    return
  }
  func.func @transform_0(%arg0: i32, %arg1: i32) -> (i32, i32) {
    %0 = arith.addi %arg0, %arg1 : i32
    %c0_i32 = arith.constant 0 : i32
    %c0_i32_0 = arith.constant 0 : i32
    return %0, %c0_i32 : i32, i32
  }
  func.func @transform_1(%arg0: i32, %arg1: i32) -> (i32, i32) {
    %c0_i32 = arith.constant 0 : i32
    %c0_i32_0 = arith.constant 0 : i32
    return %arg1, %c0_i32 : i32, i32
  }
  func.func @transform_2(%arg0: i32, %arg1: i32) -> (i32, i32) {
    %c0_i32 = arith.constant 0 : i32
    %c0_i32_0 = arith.constant 0 : i32
    %c0_i32_1 = arith.constant 0 : i32
    return %c0_i32, %c0_i32_0 : i32, i32
  }
  func.func @transform_3(%arg0: i32, %arg1: i32) -> (i32, i32) {
    %c0_i32 = arith.constant 0 : i32
    %c0_i32_0 = arith.constant 0 : i32
    return %arg0, %c0_i32 : i32, i32
  }
}

module attributes {stable_mosaic.version = 11 : i64} {
  func.func @_tap_gemm_kernel(%arg0: i32, %arg1: i32, %arg2: memref<16x128xbf16, #tpu.memory_space<vmem>>, %arg3: memref<128x256xbf16, #tpu.memory_space<vmem>>, %arg4: memref<1x256xf32, #tpu.memory_space<vmem>>, %arg5: memref<16x256xf32, #tpu.memory_space<vmem>>, %arg6: memref<16x256xf32, #tpu.memory_space<vmem>>) attributes {dimension_semantics = [#tpu.dimension_semantics<parallel>, #tpu.dimension_semantics<arbitrary>], iteration_bounds = array<i64: 8, 7>, scalar_prefetch = 0 : i64, scratch_operands = 1 : i64, tpu.core_type = #tpu.core_type<tc>, window_params = [{transform_indices = @transform_0, window_bounds = array<i64: 16, 128>}, {transform_indices = @transform_1, window_bounds = array<i64: 128, 256>}, {pipeline_mode = #tpu.pipeline_mode<synchronous>, transform_indices = @transform_2, window_bounds = array<i64: 1, 256>}, {transform_indices = @transform_3, window_bounds = array<i64: 16, 256>}]} {
    %c0_i32 = arith.constant 0 : i32
    %0 = arith.cmpi eq, %arg1, %c0_i32 : i32
    %1 = arith.extui %0 : i1 to i32
    %c0_i32_0 = arith.constant 0 : i32
    %2 = arith.cmpi ne, %1, %c0_i32_0 : i32
    scf.if %2 {
      %cst_9 = arith.constant 0.000000e+00 : f32
      %12 = vector.broadcast %cst_9 : f32 to vector<16x256xf32>
      %c0_10 = arith.constant 0 : index
      %c0_11 = arith.constant 0 : index
      %13 = vector.load %arg6[%c0_10, %c0_11] : memref<16x256xf32, #tpu.memory_space<vmem>>, vector<16x256xf32>
      tpu.vector_store %arg6[%c0_10, %c0_11], %12 {strides = array<i32>} : memref<16x256xf32, #tpu.memory_space<vmem>>, vector<16x256xf32>,
    } else {
    }
    %c0 = arith.constant 0 : index
    %c0_1 = arith.constant 0 : index
    %3 = vector.load %arg6[%c0, %c0_1] : memref<16x256xf32, #tpu.memory_space<vmem>>, vector<16x256xf32>
    %c0_2 = arith.constant 0 : index
    %c0_3 = arith.constant 0 : index
    %4 = vector.load %arg2[%c0_2, %c0_3] : memref<16x128xbf16, #tpu.memory_space<vmem>>, vector<16x128xbf16>
    %c0_4 = arith.constant 0 : index
    %c0_5 = arith.constant 0 : index
    %5 = vector.load %arg3[%c0_4, %c0_5] : memref<128x256xbf16, #tpu.memory_space<vmem>>, vector<128x256xbf16>
    %cst = arith.constant dense<0.000000e+00> : vector<16x256xf32>
    %6 = tpu.matmul %4, %5, %cst {dimension_numbers = #tpu.dot_dimension_numbers<[1], [0], [0], [1], [0, 0, 1, 1], [], []>} : vector<16x128xbf16>, vector<128x256xbf16>, vector<16x256xf32> -> vector<16x256xf32>
    %7 = arith.addf %3, %6 : vector<16x256xf32>
    %c0_6 = arith.constant 0 : index
    %c0_7 = arith.constant 0 : index
    %8 = vector.load %arg6[%c0_6, %c0_7] : memref<16x256xf32, #tpu.memory_space<vmem>>, vector<16x256xf32>
    tpu.vector_store %arg6[%c0_6, %c0_7], %7 {strides = array<i32>} : memref<16x256xf32, #tpu.memory_space<vmem>>, vector<16x256xf32>,
    %c6_i32 = arith.constant 6 : i32
    %9 = arith.cmpi eq, %arg1, %c6_i32 : i32
    %10 = arith.extui %9 : i1 to i32
    %c0_i32_8 = arith.constant 0 : i32
    %11 = arith.cmpi ne, %10, %c0_i32_8 : i32
    scf.if %11 {
      %c0_9 = arith.constant 0 : index
      %c0_10 = arith.constant 0 : index
      %12 = vector.load %arg6[%c0_9, %c0_10] : memref<16x256xf32, #tpu.memory_space<vmem>>, vector<16x256xf32>
      %c0_11 = arith.constant 0 : index
      %c0_12 = arith.constant 0 : index
      %13 = vector.load %arg4[%c0_11, %c0_12] : memref<1x256xf32, #tpu.memory_space<vmem>>, vector<1x256xf32>
      %14 = vector.broadcast %13 : vector<1x256xf32> to vector<16x256xf32>
      %15 = arith.addf %12, %14 : vector<16x256xf32>
      %cst_13 = arith.constant 0.000000e+00 : f32
      %16 = vector.broadcast %cst_13 : f32 to vector<16x256xf32>
      %17 = arith.maximumf %15, %16 : vector<16x256xf32>
      %c0_14 = arith.constant 0 : index
      %c0_15 = arith.constant 0 : index
      %18 = vector.load %arg5[%c0_14, %c0_15] : memref<16x256xf32, #tpu.memory_space<vmem>>, vector<16x256xf32>
      tpu.vector_store %arg5[%c0_14, %c0_15], %17 {strides = array<i32>} : memref<16x256xf32, #tpu.memory_space<vmem>>, vector<16x256xf32>,
    } else {
    }
    return
  }
  func.func @transform_0(%arg0: i32, %arg1: i32) -> (i32, i32) {
    %0 = arith.addi %arg0, %arg1 : i32
    %c0_i32 = arith.constant 0 : i32
    %c0_i32_0 = arith.constant 0 : i32
    return %0, %c0_i32 : i32, i32
  }
  func.func @transform_1(%arg0: i32, %arg1: i32) -> (i32, i32) {
    %c0_i32 = arith.constant 0 : i32
    %c0_i32_0 = arith.constant 0 : i32
    return %arg1, %c0_i32 : i32, i32
  }
  func.func @transform_2(%arg0: i32, %arg1: i32) -> (i32, i32) {
    %c0_i32 = arith.constant 0 : i32
    %c0_i32_0 = arith.constant 0 : i32
    %c0_i32_1 = arith.constant 0 : i32
    return %c0_i32, %c0_i32_0 : i32, i32
  }
  func.func @transform_3(%arg0: i32, %arg1: i32) -> (i32, i32) {
    %c0_i32 = arith.constant 0 : i32
    %c0_i32_0 = arith.constant 0 : i32
    return %arg0, %c0_i32 : i32, i32
  }
}

</mosaic_0001>

<llo_original>
// kernel: _lambda_.15
$region0: #{_lambda_.15}
  #allocation0 [shape = 'u32[]', space=smem, size = 0x4, offset = 0x4, fixed_abs, tag = 'smem constant byte address 0x4 - core index']
  #allocation1 [shape = 'u32[144,128]{1,0:T(1,128)}', space=vmem, size = 0x12000, scoped, tag = 'internal scratch']
  %s0 = inlined_call_operand.vmem [shape: bf16[128,16], index: 0, kind: input, shape index: {}]
  %s1 = inlined_call_operand.vmem [shape: bf16[16,256], index: 1, kind: input, shape index: {}]
  %s2 = inlined_call_operand.vmem [shape: f32[1,256], index: 2, kind: input, shape index: {}]
  %s3 = inlined_call_operand.vmem [shape: f32[128,256], index: 3, kind: output, shape index: {}]
  %s4 = sld [smem:[#allocation0]]
  $region22: #{_lambda_.15} parent=0
    _
  %s6 = ssub.s32 1, %s4
  %s7 = scalar_select 0, %s6, %s4
  // Predicated region
  $region2: #{_lambda_.15} parent=0 // pred_check
    _
  $region3: #{_lambda_.15} parent=0 // pred_check_branch
    %9 = sbr.rel (0) target = $region5
  $region4: #{_lambda_.15} parent=0 // pred_region
    _
  $region5: #{_lambda_.15} parent=0 // pred_fallthru
    _
  // Predicated region
  $region6: #{_lambda_.15} parent=0 // pred_check
    _
  $region7: #{_lambda_.15} parent=0 // pred_check_branch
    %11 = sbr.rel (0) target = $region9
  $region8: #{_lambda_.15} parent=0 // pred_region
    _
  $region9: #{_lambda_.15} parent=0 // pred_fallthru
    _
  // Predicated region
  $region10: #{_lambda_.15} parent=0 // pred_check
    _
  $region11: #{_lambda_.15} parent=0 // pred_check_branch
    %13 = sbr.rel (0) target = $region13
  $region12: #{_lambda_.15} parent=0 // pred_region
    _
  $region13: #{_lambda_.15} parent=0 // pred_fallthru
    _
  %v15 = vld [vmem:[%s0] sm:$0xf]
  %v16 = vld [vmem:[%s0 + $0x4] sm:$0xf]
  %v17 = vld [vmem:[%s0 + $0x8] sm:$0xf]
  %v18 = vld [vmem:[%s0 + $0xc] sm:$0xf]
  %v19 = vld [vmem:[%s0 + $0x10] sm:$0xf]
  %v20 = vld [vmem:[%s0 + $0x14] sm:$0xf]
  %v21 = vld [vmem:[%s0 + $0x18] sm:$0xf]
  %v22 = vld [vmem:[%s0 + $0x1c] sm:$0xf]
  %v23 = vld [vmem:[%s0 + $0x20] sm:$0xf]
  %v24 = vld [vmem:[%s0 + $0x24] sm:$0xf]
  %v25 = vld [vmem:[%s0 + $0x28] sm:$0xf]
  %v26 = vld [vmem:[%s0 + $0x2c] sm:$0xf]
  %v27 = vld [vmem:[%s0 + $0x30] sm:$0xf]
  %v28 = vld [vmem:[%s0 + $0x34] sm:$0xf]
  %v29 = vld [vmem:[%s0 + $0x38] sm:$0xf]
  %v30 = vld [vmem:[%s0 + $0x3c] sm:$0xf]
  %v31 = vld [vmem:[%s1] sm:$0xff]
  %v32 = vld [vmem:[%s1 + $0x8] sm:$0xff]
  %v33 = vld [vmem:[%s2] sm:$0x3]
  %v35 = vlaneseq
  %v36 = vshrl.u32 %v35, 7
  %v37 = vsub.s32 0, %v36
  %v38 = vrot.slane %v33, %v37
  %v39 = vlaneseq
  %v40 = vshrl.u32 %v39, 7
  %v41 = vsub.s32 1, %v40
  %v42 = vrot.slane %v33, %v41
  %v61 = vunpack.c.l.b16 %v15
  %v62 = vunpack.c.l.b16 %v16
  %v63 = vunpack.c.l.b16 %v17
  %v64 = vunpack.c.l.b16 %v18
  %v65 = vunpack.c.l.b16 %v19
  %v66 = vunpack.c.l.b16 %v20
  %v67 = vunpack.c.l.b16 %v21
  %v68 = vunpack.c.l.b16 %v22
  %v69 = vunpack.c.l.b16 %v23
  %v70 = vunpack.c.l.b16 %v24
  %v71 = vunpack.c.l.b16 %v25
  %v72 = vunpack.c.l.b16 %v26
  %v73 = vunpack.c.l.b16 %v27
  %v74 = vunpack.c.l.b16 %v28
  %v75 = vunpack.c.l.b16 %v29
  %v76 = vunpack.c.l.b16 %v30
  %v77 = vpack.c.b16 %v62, %v61
  %v78 = vpack.c.b16 %v64, %v63
  %v79 = vpack.c.b16 %v66, %v65
  %v80 = vpack.c.b16 %v68, %v67
  %v81 = vpack.c.b16 %v70, %v69
  %v82 = vpack.c.b16 %v72, %v71
  %v83 = vpack.c.b16 %v74, %v73
  %v84 = vpack.c.b16 %v76, %v75
  %v87 = vunpack.c.l.b16 %v31
  %v88 = vunpack.c.h.b16 %v31
  %v89 = vunpack.c.l.b16 %v32
  %v90 = vunpack.c.h.b16 %v32
  %v91 = vpack.c.b16 %v89, %v87
  %v92 = vpack.c.b16 %v90, %v88
  %vm95 = vcmask 130048
  %v97 = vsel %vm95, %v77, 0
  %v100 = vsel %vm95, %v78, 0
  %v103 = vsel %vm95, %v79, 0
  %v106 = vsel %vm95, %v80, 0
  %v109 = vsel %vm95, %v81, 0
  %v112 = vsel %vm95, %v82, 0
  %v115 = vsel %vm95, %v83, 0
  %v118 = vsel %vm95, %v84, 0
  %120 = vmatprep.subr.bf16.mxu0 %v92
  %121 = vmatpush1.bf16.msra.mxu0 %v91
  %122 = vmatprep.subr.bf16.mxu0 0
  %123 = vmatpush1.bf16.msra.mxu0 0
  %124 = vmatprep.subr.bf16.mxu0 0
  %125 = vmatpush1.bf16.msra.mxu0 0
  %126 = vmatprep.subr.bf16.mxu0 0
  %127 = vmatpush1.bf16.msra.mxu0 0
  %128 = vmatprep.subr.bf16.mxu0 0
  %129 = vmatpush1.bf16.msra.mxu0 0
  %130 = vmatprep.subr.bf16.mxu0 0
  %131 = vmatpush1.bf16.msra.mxu0 0
  %132 = vmatprep.subr.bf16.mxu0 0
  %133 = vmatpush1.bf16.msra.mxu0 0
  %134 = vmatprep.subr.bf16.mxu0 0
  %135 = vmatpush1.bf16.msra.mxu0 0
  %136 = vmatprep.subr.bf16.mxu0 0
  %137 = vmatpush1.bf16.msra.mxu0 0
  %138 = vmatprep.subr.bf16.mxu0 0
  %139 = vmatpush1.bf16.msra.mxu0 0
  %140 = vmatprep.subr.bf16.mxu0 0
  %141 = vmatpush1.bf16.msra.mxu0 0
  %142 = vmatprep.subr.bf16.mxu0 0
  %143 = vmatpush1.bf16.msra.mxu0 0
  %144 = vmatprep.subr.bf16.mxu0 0
  %145 = vmatpush1.bf16.msra.mxu0 0
  %146 = vmatprep.subr.bf16.mxu0 0
  %147 = vmatpush1.bf16.msra.mxu0 0
  %148 = vmatprep.subr.bf16.mxu0 0
  %149 = vmatpush1.bf16.msra.mxu0 0
  %150 = vmatprep.subr.bf16.mxu0 0
  %151 = vmatpush1.bf16.msra.mxu0 0
  %152 = vmatprep.mubr.bf16.mxu0 0
  %153 = vmatmul.mubr.bf16.gmra.mrb[0].mxu0 %v97
  %v154 = vpop.f32.mrb[0].mxu0
  %v155 = vadd.f32 %v38, %v154
  %v156 = vpop.f32.mrb[0].mxu0
  %v157 = vadd.f32 %v42, %v156
  %v158 = vpop.f32.mrb[0].mxu0
  %v159 = vadd.f32 %v38, %v158
  %v160 = vpop.f32.mrb[0].mxu0
  %v161 = vadd.f32 %v42, %v160
  %162 = vmatprep.mubr.bf16.mxu0 0
  %163 = vmatmul.mubr.bf16.gmra.mrb[0].mxu0 %v100
  %v164 = vpop.f32.mrb[0].mxu0
  %v165 = vadd.f32 %v38, %v164
  %v166 = vpop.f32.mrb[0].mxu0
  %v167 = vadd.f32 %v42, %v166
  %v168 = vpop.f32.mrb[0].mxu0
  %v169 = vadd.f32 %v38, %v168
  %v170 = vpop.f32.mrb[0].mxu0
  %v171 = vadd.f32 %v42, %v170
  %172 = vmatprep.mubr.bf16.mxu0 0
  %173 = vmatmul.mubr.bf16.gmra.mrb[0].mxu0 %v103
  %v174 = vpop.f32.mrb[0].mxu0
  %v175 = vadd.f32 %v38, %v174
  %v176 = vpop.f32.mrb[0].mxu0
  %v177 = vadd.f32 %v42, %v176
  %v178 = vpop.f32.mrb[0].mxu0
  %v179 = vadd.f32 %v38, %v178
  %v180 = vpop.f32.mrb[0].mxu0
  %v181 = vadd.f32 %v42, %v180
  %182 = vmatprep.mubr.bf16.mxu0 0
  %183 = vmatmul.mubr.bf16.gmra.mrb[0].mxu0 %v106
  %v184 = vpop.f32.mrb[0].mxu0
  %v185 = vadd.f32 %v38, %v184
  %v186 = vpop.f32.mrb[0].mxu0
  %v187 = vadd.f32 %v42, %v186
  %v188 = vpop.f32.mrb[0].mxu0
  %v189 = vadd.f32 %v38, %v188
  %v190 = vpop.f32.mrb[0].mxu0
  %v191 = vadd.f32 %v42, %v190
  %192 = vmatprep.mubr.bf16.mxu0 0
  %193 = vmatmul.mubr.bf16.gmra.mrb[0].mxu0 %v109
  %v194 = vpop.f32.mrb[0].mxu0
  %v195 = vadd.f32 %v38, %v194
  %v196 = vpop.f32.mrb[0].mxu0
  %v197 = vadd.f32 %v42, %v196
  %v198 = vpop.f32.mrb[0].mxu0
  %v199 = vadd.f32 %v38, %v198
  %v200 = vpop.f32.mrb[0].mxu0
  %v201 = vadd.f32 %v42, %v200
  %202 = vmatprep.mubr.bf16.mxu0 0
  %203 = vmatmul.mubr.bf16.gmra.mrb[0].mxu0 %v112
  %v204 = vpop.f32.mrb[0].mxu0
  %v205 = vadd.f32 %v38, %v204
  %v206 = vpop.f32.mrb[0].mxu0
  %v207 = vadd.f32 %v42, %v206
  %v208 = vpop.f32.mrb[0].mxu0
  %v209 = vadd.f32 %v38, %v208
  %v210 = vpop.f32.mrb[0].mxu0
  %v211 = vadd.f32 %v42, %v210
  %212 = vmatprep.mubr.bf16.mxu0 0
  %213 = vmatmul.mubr.bf16.gmra.mrb[0].mxu0 %v115
  %v214 = vpop.f32.mrb[0].mxu0
  %v215 = vadd.f32 %v38, %v214
  %v216 = vpop.f32.mrb[0].mxu0
  %v217 = vadd.f32 %v42, %v216
  %v218 = vpop.f32.mrb[0].mxu0
  %v219 = vadd.f32 %v38, %v218
  %v220 = vpop.f32.mrb[0].mxu0
  %v221 = vadd.f32 %v42, %v220
  %222 = vmatprep.mubr.bf16.mxu0 0
  %223 = vmatmul.mubr.bf16.gmra.mrb[0].mxu0 %v118
  %v224 = vpop.f32.mrb[0].mxu0
  %v225 = vadd.f32 %v38, %v224
  %v226 = vpop.f32.mrb[0].mxu0
  %v227 = vadd.f32 %v42, %v226
  %v228 = vpop.f32.mrb[0].mxu0
  %v229 = vadd.f32 %v38, %v228
  %v230 = vpop.f32.mrb[0].mxu0
  %v231 = vadd.f32 %v42, %v230
  %232 = vdwg.mxu0
  %v233 = vmax.f32 %v155, 0.0
  %v234 = vmax.f32 %v157, 0.0
  %v235 = vmax.f32 %v159, 0.0
  %v236 = vmax.f32 %v161, 0.0
  %v237 = vmax.f32 %v165, 0.0
  %v238 = vmax.f32 %v167, 0.0
  %v239 = vmax.f32 %v169, 0.0
  %v240 = vmax.f32 %v171, 0.0
  %v241 = vmax.f32 %v175, 0.0
  %v242 = vmax.f32 %v177, 0.0
  %v243 = vmax.f32 %v179, 0.0
  %v244 = vmax.f32 %v181, 0.0
  %v245 = vmax.f32 %v185, 0.0
  %v246 = vmax.f32 %v187, 0.0
  %v247 = vmax.f32 %v189, 0.0
  %v248 = vmax.f32 %v191, 0.0
  %v249 = vmax.f32 %v195, 0.0
  %v250 = vmax.f32 %v197, 0.0
  %v251 = vmax.f32 %v199, 0.0
  %v252 = vmax.f32 %v201, 0.0
  %v253 = vmax.f32 %v205, 0.0
  %v254 = vmax.f32 %v207, 0.0
  %v255 = vmax.f32 %v209, 0.0
  %v256 = vmax.f32 %v211, 0.0
  %v257 = vmax.f32 %v215, 0.0
  %v258 = vmax.f32 %v217, 0.0
  %v259 = vmax.f32 %v219, 0.0
  %v260 = vmax.f32 %v221, 0.0
  %v261 = vmax.f32 %v225, 0.0
  %v262 = vmax.f32 %v227, 0.0
  %v263 = vmax.f32 %v229, 0.0
  %v264 = vmax.f32 %v231, 0.0
  %265 = vst [vmem:[%s3] sm:$0xff] %v233
  %266 = vst [vmem:[%s3 + $0x8] sm:$0xff] %v234
  %267 = vst [vmem:[%s3 + $0x10] sm:$0xff] %v235
  %268 = vst [vmem:[%s3 + $0x18] sm:$0xff] %v236
  %269 = vst [vmem:[%s3 + $0x20] sm:$0xff] %v237
  %270 = vst [vmem:[%s3 + $0x28] sm:$0xff] %v238
  %271 = vst [vmem:[%s3 + $0x30] sm:$0xff] %v239
  %272 = vst [vmem:[%s3 + $0x38] sm:$0xff] %v240
  %273 = vst [vmem:[%s3 + $0x40] sm:$0xff] %v241
  %274 = vst [vmem:[%s3 + $0x48] sm:$0xff] %v242
  %275 = vst [vmem:[%s3 + $0x50] sm:$0xff] %v243
  %276 = vst [vmem:[%s3 + $0x58] sm:$0xff] %v244
  %277 = vst [vmem:[%s3 + $0x60] sm:$0xff] %v245
  %278 = vst [vmem:[%s3 + $0x68] sm:$0xff] %v246
  %279 = vst [vmem:[%s3 + $0x70] sm:$0xff] %v247
  %280 = vst [vmem:[%s3 + $0x78] sm:$0xff] %v248
  %281 = vst [vmem:[%s3 + $0x80] sm:$0xff] %v249
  %282 = vst [vmem:[%s3 + $0x88] sm:$0xff] %v250
  %283 = vst [vmem:[%s3 + $0x90] sm:$0xff] %v251
  %284 = vst [vmem:[%s3 + $0x98] sm:$0xff] %v252
  %285 = vst [vmem:[%s3 + $0xa0] sm:$0xff] %v253
  %286 = vst [vmem:[%s3 + $0xa8] sm:$0xff] %v254
  %287 = vst [vmem:[%s3 + $0xb0] sm:$0xff] %v255
  %288 = vst [vmem:[%s3 + $0xb8] sm:$0xff] %v256
  %289 = vst [vmem:[%s3 + $0xc0] sm:$0xff] %v257
  %290 = vst [vmem:[%s3 + $0xc8] sm:$0xff] %v258
  %291 = vst [vmem:[%s3 + $0xd0] sm:$0xff] %v259
  %292 = vst [vmem:[%s3 + $0xd8] sm:$0xff] %v260
  %293 = vst [vmem:[%s3 + $0xe0] sm:$0xff] %v261
  %294 = vst [vmem:[%s3 + $0xe8] sm:$0xff] %v262
  %295 = vst [vmem:[%s3 + $0xf0] sm:$0xff] %v263
  %296 = vst [vmem:[%s3 + $0xf8] sm:$0xff] %v264
  // Predicated region
  $region14: #{_lambda_.15} parent=0 // pred_check
    _
  $region15: #{_lambda_.15} parent=0 // pred_check_branch
    %298 = sbr.rel (0) target = $region17
  $region16: #{_lambda_.15} parent=0 // pred_region
    _
  $region17: #{_lambda_.15} parent=0 // pred_fallthru
    _
  // Predicated region
  $region18: #{_lambda_.15} parent=0 // pred_check
    _
  $region19: #{_lambda_.15} parent=0 // pred_check_branch
    %300 = sbr.rel (0) target = $region21
  $region20: #{_lambda_.15} parent=0 // pred_region
    _
  $region21: #{_lambda_.15} parent=0 // pred_fallthru
    _

// kernel: _lambda_.8
$region0: #{_lambda_.8}
  #allocation0 [shape = 'u32[]', space=smem, size = 0x4, offset = 0x4, fixed_abs, tag = 'smem constant byte address 0x4 - core index']
  #allocation1 [shape = 'u32[144,128]{1,0:T(1,128)}', space=vmem, size = 0x12000, scoped, tag = 'internal scratch']
  %s0 = inlined_call_operand.vmem [shape: bf16[128,16], index: 0, kind: input, shape index: {}]
  %s1 = inlined_call_operand.vmem [shape: bf16[16,512], index: 1, kind: input, shape index: {}]
  %s2 = inlined_call_operand.vmem [shape: f32[1,512], index: 2, kind: input, shape index: {}]
  %s3 = inlined_call_operand.vmem [shape: f32[128,512], index: 3, kind: output, shape index: {}]
  %s4 = sld [smem:[#allocation0]]
  $region22: #{_lambda_.8} parent=0
    _
  %s6 = ssub.s32 1, %s4
  %s7 = scalar_select 0, %s6, %s4
  // Predicated region
  $region2: #{_lambda_.8} parent=0 // pred_check
    _
  $region3: #{_lambda_.8} parent=0 // pred_check_branch
    %9 = sbr.rel (0) target = $region5
  $region4: #{_lambda_.8} parent=0 // pred_region
    _
  $region5: #{_lambda_.8} parent=0 // pred_fallthru
    _
  // Predicated region
  $region6: #{_lambda_.8} parent=0 // pred_check
    _
  $region7: #{_lambda_.8} parent=0 // pred_check_branch
    %11 = sbr.rel (0) target = $region9
  $region8: #{_lambda_.8} parent=0 // pred_region
    _
  $region9: #{_lambda_.8} parent=0 // pred_fallthru
    _
  // Predicated region
  $region10: #{_lambda_.8} parent=0 // pred_check
    _
  $region11: #{_lambda_.8} parent=0 // pred_check_branch
    %13 = sbr.rel (0) target = $region13
  $region12: #{_lambda_.8} parent=0 // pred_region
    _
  $region13: #{_lambda_.8} parent=0 // pred_fallthru
    _
  %v15 = vld [vmem:[%s0] sm:$0xf]
  %v16 = vld [vmem:[%s0 + $0x4] sm:$0xf]
  %v17 = vld [vmem:[%s0 + $0x8] sm:$0xf]
  %v18 = vld [vmem:[%s0 + $0xc] sm:$0xf]
  %v19 = vld [vmem:[%s0 + $0x10] sm:$0xf]
  %v20 = vld [vmem:[%s0 + $0x14] sm:$0xf]
  %v21 = vld [vmem:[%s0 + $0x18] sm:$0xf]
  %v22 = vld [vmem:[%s0 + $0x1c] sm:$0xf]
  %v23 = vld [vmem:[%s0 + $0x20] sm:$0xf]
  %v24 = vld [vmem:[%s0 + $0x24] sm:$0xf]
  %v25 = vld [vmem:[%s0 + $0x28] sm:$0xf]
  %v26 = vld [vmem:[%s0 + $0x2c] sm:$0xf]
  %v27 = vld [vmem:[%s0 + $0x30] sm:$0xf]
  %v28 = vld [vmem:[%s0 + $0x34] sm:$0xf]
  %v29 = vld [vmem:[%s0 + $0x38] sm:$0xf]
  %v30 = vld [vmem:[%s0 + $0x3c] sm:$0xf]
  %v31 = vld [vmem:[%s1] sm:$0xff]
  %v32 = vld [vmem:[%s1 + $0x8] sm:$0xff]
  %v33 = vld [vmem:[%s1 + $0x10] sm:$0xff]
  %v34 = vld [vmem:[%s1 + $0x18] sm:$0xff]
  %v35 = vld [vmem:[%s2] sm:$0xf]
  %v37 = vlaneseq
  %v38 = vshrl.u32 %v37, 7
  %v39 = vsub.s32 0, %v38
  %v40 = vrot.slane %v35, %v39
  %v41 = vlaneseq
  %v42 = vshrl.u32 %v41, 7
  %v43 = vsub.s32 1, %v42
  %v44 = vrot.slane %v35, %v43
  %v45 = vlaneseq
  %v46 = vshrl.u32 %v45, 7
  %v47 = vsub.s32 2, %v46
  %v48 = vrot.slane %v35, %v47
  %v49 = vlaneseq
  %v50 = vshrl.u32 %v49, 7
  %v51 = vsub.s32 3, %v50
  %v52 = vrot.slane %v35, %v51
  %v73 = vunpack.c.l.b16 %v15
  %v74 = vunpack.c.l.b16 %v16
  %v75 = vunpack.c.l.b16 %v17
  %v76 = vunpack.c.l.b16 %v18
  %v77 = vunpack.c.l.b16 %v19
  %v78 = vunpack.c.l.b16 %v20
  %v79 = vunpack.c.l.b16 %v21
  %v80 = vunpack.c.l.b16 %v22
  %v81 = vunpack.c.l.b16 %v23
  %v82 = vunpack.c.l.b16 %v24
  %v83 = vunpack.c.l.b16 %v25
  %v84 = vunpack.c.l.b16 %v26
  %v85 = vunpack.c.l.b16 %v27
  %v86 = vunpack.c.l.b16 %v28
  %v87 = vunpack.c.l.b16 %v29
  %v88 = vunpack.c.l.b16 %v30
  %v89 = vpack.c.b16 %v74, %v73
  %v90 = vpack.c.b16 %v76, %v75
  %v91 = vpack.c.b16 %v78, %v77
  %v92 = vpack.c.b16 %v80, %v79
  %v93 = vpack.c.b16 %v82, %v81
  %v94 = vpack.c.b16 %v84, %v83
  %v95 = vpack.c.b16 %v86, %v85
  %v96 = vpack.c.b16 %v88, %v87
  %v101 = vunpack.c.l.b16 %v31
  %v102 = vunpack.c.h.b16 %v31
  %v103 = vunpack.c.l.b16 %v32
  %v104 = vunpack.c.h.b16 %v32
  %v105 = vunpack.c.l.b16 %v33
  %v106 = vunpack.c.h.b16 %v33
  %v107 = vunpack.c.l.b16 %v34
  %v108 = vunpack.c.h.b16 %v34
  %v109 = vpack.c.b16 %v105, %v101
  %v110 = vpack.c.b16 %v106, %v102
  %v111 = vpack.c.b16 %v107, %v103
  %v112 = vpack.c.b16 %v108, %v104
  %vm117 = vcmask 130048
  %v119 = vsel %vm117, %v89, 0
  %v122 = vsel %vm117, %v90, 0
  %v125 = vsel %vm117, %v91, 0
  %v128 = vsel %vm117, %v92, 0
  %v131 = vsel %vm117, %v93, 0
  %v134 = vsel %vm117, %v94, 0
  %v137 = vsel %vm117, %v95, 0
  %v140 = vsel %vm117, %v96, 0
  %142 = vmatprep.subr.bf16.mxu0 %v110
  %143 = vmatpush1.bf16.msra.mxu0 %v109
  %144 = vmatprep.subr.bf16.mxu0 0
  %145 = vmatpush1.bf16.msra.mxu0 0
  %146 = vmatprep.subr.bf16.mxu0 0
  %147 = vmatpush1.bf16.msra.mxu0 0
  %148 = vmatprep.subr.bf16.mxu0 0
  %149 = vmatpush1.bf16.msra.mxu0 0
  %150 = vmatprep.subr.bf16.mxu0 0
  %151 = vmatpush1.bf16.msra.mxu0 0
  %152 = vmatprep.subr.bf16.mxu0 0
  %153 = vmatpush1.bf16.msra.mxu0 0
  %154 = vmatprep.subr.bf16.mxu0 0
  %155 = vmatpush1.bf16.msra.mxu0 0
  %156 = vmatprep.subr.bf16.mxu0 0
  %157 = vmatpush1.bf16.msra.mxu0 0
  %158 = vmatprep.subr.bf16.mxu0 0
  %159 = vmatpush1.bf16.msra.mxu0 0
  %160 = vmatprep.subr.bf16.mxu0 0
  %161 = vmatpush1.bf16.msra.mxu0 0
  %162 = vmatprep.subr.bf16.mxu0 0
  %163 = vmatpush1.bf16.msra.mxu0 0
  %164 = vmatprep.subr.bf16.mxu0 0
  %165 = vmatpush1.bf16.msra.mxu0 0
  %166 = vmatprep.subr.bf16.mxu0 0
  %167 = vmatpush1.bf16.msra.mxu0 0
  %168 = vmatprep.subr.bf16.mxu0 0
  %169 = vmatpush1.bf16.msra.mxu0 0
  %170 = vmatprep.subr.bf16.mxu0 0
  %171 = vmatpush1.bf16.msra.mxu0 0
  %172 = vmatprep.subr.bf16.mxu0 0
  %173 = vmatpush1.bf16.msra.mxu0 0
  %174 = vmatprep.mubr.bf16.mxu0 0
  %175 = vmatmul.mubr.bf16.gmra.mrb[0].mxu0 %v119
  %v176 = vpop.f32.mrb[0].mxu0
  %v177 = vadd.f32 %v40, %v176
  %v178 = vpop.f32.mrb[0].mxu0
  %v179 = vadd.f32 %v44, %v178
  %v180 = vpop.f32.mrb[0].mxu0
  %v181 = vadd.f32 %v40, %v180
  %v182 = vpop.f32.mrb[0].mxu0
  %v183 = vadd.f32 %v44, %v182
  %184 = vmatprep.mubr.bf16.mxu0 0
  %185 = vmatmul.mubr.bf16.gmra.mrb[0].mxu0 %v122
  %v186 = vpop.f32.mrb[0].mxu0
  %v187 = vadd.f32 %v40, %v186
  %v188 = vpop.f32.mrb[0].mxu0
  %v189 = vadd.f32 %v44, %v188
  %v190 = vpop.f32.mrb[0].mxu0
  %v191 = vadd.f32 %v40, %v190
  %v192 = vpop.f32.mrb[0].mxu0
  %v193 = vadd.f32 %v44, %v192
  %194 = vmatprep.mubr.bf16.mxu0 0
  %195 = vmatmul.mubr.bf16.gmra.mrb[0].mxu0 %v125
  %v196 = vpop.f32.mrb[0].mxu0
  %v197 = vadd.f32 %v40, %v196
  %v198 = vpop.f32.mrb[0].mxu0
  %v199 = vadd.f32 %v44, %v198
  %v200 = vpop.f32.mrb[0].mxu0
  %v201 = vadd.f32 %v40, %v200
  %v202 = vpop.f32.mrb[0].mxu0
  %v203 = vadd.f32 %v44, %v202
  %204 = vmatprep.mubr.bf16.mxu0 0
  %205 = vmatmul.mubr.bf16.gmra.mrb[0].mxu0 %v128
  %v206 = vpop.f32.mrb[0].mxu0
  %v207 = vadd.f32 %v40, %v206
  %v208 = vpop.f32.mrb[0].mxu0
  %v209 = vadd.f32 %v44, %v208
  %v210 = vpop.f32.mrb[0].mxu0
  %v211 = vadd.f32 %v40, %v210
  %v212 = vpop.f32.mrb[0].mxu0
  %v213 = vadd.f32 %v44, %v212
  %214 = vmatprep.mubr.bf16.mxu0 0
  %215 = vmatmul.mubr.bf16.gmra.mrb[0].mxu0 %v131
  %v216 = vpop.f32.mrb[0].mxu0
  %v217 = vadd.f32 %v40, %v216
  %v218 = vpop.f32.mrb[0].mxu0
  %v219 = vadd.f32 %v44, %v218
  %v220 = vpop.f32.mrb[0].mxu0
  %v221 = vadd.f32 %v40, %v220
  %v222 = vpop.f32.mrb[0].mxu0
  %v223 = vadd.f32 %v44, %v222
  %224 = vmatprep.mubr.bf16.mxu0 0
  %225 = vmatmul.mubr.bf16.gmra.mrb[0].mxu0 %v134
  %v226 = vpop.f32.mrb[0].mxu0
  %v227 = vadd.f32 %v40, %v226
  %v228 = vpop.f32.mrb[0].mxu0
  %v229 = vadd.f32 %v44, %v228
  %v230 = vpop.f32.mrb[0].mxu0
  %v231 = vadd.f32 %v40, %v230
  %v232 = vpop.f32.mrb[0].mxu0
  %v233 = vadd.f32 %v44, %v232
  %234 = vmatprep.mubr.bf16.mxu0 0
  %235 = vmatmul.mubr.bf16.gmra.mrb[0].mxu0 %v137
  %v236 = vpop.f32.mrb[0].mxu0
  %v237 = vadd.f32 %v40, %v236
  %v238 = vpop.f32.mrb[0].mxu0
  %v239 = vadd.f32 %v44, %v238
  %v240 = vpop.f32.mrb[0].mxu0
  %v241 = vadd.f32 %v40, %v240
  %v242 = vpop.f32.mrb[0].mxu0
  %v243 = vadd.f32 %v44, %v242
  %244 = vmatprep.mubr.bf16.mxu0 0
  %245 = vmatmul.mubr.bf16.gmra.mrb[0].mxu0 %v140
  %v246 = vpop.f32.mrb[0].mxu0
  %v247 = vadd.f32 %v40, %v246
  %v248 = vpop.f32.mrb[0].mxu0
  %v249 = vadd.f32 %v44, %v248
  %v250 = vpop.f32.mrb[0].mxu0
  %v251 = vadd.f32 %v40, %v250
  %v252 = vpop.f32.mrb[0].mxu0
  %v253 = vadd.f32 %v44, %v252
  %254 = vdwg.mxu0
  %255 = vmatprep.subr.bf16.mxu0 %v112
  %256 = vmatpush1.bf16.msra.mxu0 %v111
  %257 = vmatprep.subr.bf16.mxu0 0
  %258 = vmatpush1.bf16.msra.mxu0 0
  %259 = vmatprep.subr.bf16.mxu0 0
  %260 = vmatpush1.bf16.msra.mxu0 0
  %261 = vmatprep.subr.bf16.mxu0 0
  %262 = vmatpush1.bf16.msra.mxu0 0
  %263 = vmatprep.subr.bf16.mxu0 0
  %264 = vmatpush1.bf16.msra.mxu0 0
  %265 = vmatprep.subr.bf16.mxu0 0
  %266 = vmatpush1.bf16.msra.mxu0 0
  %267 = vmatprep.subr.bf16.mxu0 0
  %268 = vmatpush1.bf16.msra.mxu0 0
  %269 = vmatprep.subr.bf16.mxu0 0
  %270 = vmatpush1.bf16.msra.mxu0 0
  %271 = vmatprep.subr.bf16.mxu0 0
  %272 = vmatpush1.bf16.msra.mxu0 0
  %273 = vmatprep.subr.bf16.mxu0 0
  %274 = vmatpush1.bf16.msra.mxu0 0
  %275 = vmatprep.subr.bf16.mxu0 0
  %276 = vmatpush1.bf16.msra.mxu0 0
  %277 = vmatprep.subr.bf16.mxu0 0
  %278 = vmatpush1.bf16.msra.mxu0 0
  %279 = vmatprep.subr.bf16.mxu0 0
  %280 = vmatpush1.bf16.msra.mxu0 0
  %281 = vmatprep.subr.bf16.mxu0 0
  %282 = vmatpush1.bf16.msra.mxu0 0
  %283 = vmatprep.subr.bf16.mxu0 0
  %284 = vmatpush1.bf16.msra.mxu0 0
  %285 = vmatprep.subr.bf16.mxu0 0
  %286 = vmatpush1.bf16.msra.mxu0 0
  %287 = vmatprep.mubr.bf16.mxu0 0
  %288 = vmatmul.mubr.bf16.gmra.mrb[0].mxu0 %v119
  %v289 = vpop.f32.mrb[0].mxu0
  %v290 = vadd.f32 %v48, %v289
  %v291 = vpop.f32.mrb[0].mxu0
  %v292 = vadd.f32 %v52, %v291
  %v293 = vpop.f32.mrb[0].mxu0
  %v294 = vadd.f32 %v48, %v293
  %v295 = vpop.f32.mrb[0].mxu0
  %v296 = vadd.f32 %v52, %v295
  %297 = vmatprep.mubr.bf16.mxu0 0
  %298 = vmatmul.mubr.bf16.gmra.mrb[0].mxu0 %v122
  %v299 = vpop.f32.mrb[0].mxu0
  %v300 = vadd.f32 %v48, %v299
  %v301 = vpop.f32.mrb[0].mxu0
  %v302 = vadd.f32 %v52, %v301
  %v303 = vpop.f32.mrb[0].mxu0
  %v304 = vadd.f32 %v48, %v303
  %v305 = vpop.f32.mrb[0].mxu0
  %v306 = vadd.f32 %v52, %v305
  %307 = vmatprep.mubr.bf16.mxu0 0
  %308 = vmatmul.mubr.bf16.gmra.mrb[0].mxu0 %v125
  %v309 = vpop.f32.mrb[0].mxu0
  %v310 = vadd.f32 %v48, %v309
  %v311 = vpop.f32.mrb[0].mxu0
  %v312 = vadd.f32 %v52, %v311
  %v313 = vpop.f32.mrb[0].mxu0
  %v314 = vadd.f32 %v48, %v313
  %v315 = vpop.f32.mrb[0].mxu0
  %v316 = vadd.f32 %v52, %v315
  %317 = vmatprep.mubr.bf16.mxu0 0
  %318 = vmatmul.mubr.bf16.gmra.mrb[0].mxu0 %v128
  %v319 = vpop.f32.mrb[0].mxu0
  %v320 = vadd.f32 %v48, %v319
  %v321 = vpop.f32.mrb[0].mxu0
  %v322 = vadd.f32 %v52, %v321
  %v323 = vpop.f32.mrb[0].mxu0
  %v324 = vadd.f32 %v48, %v323
  %v325 = vpop.f32.mrb[0].mxu0
  %v326 = vadd.f32 %v52, %v325
  %327 = vmatprep.mubr.bf16.mxu0 0
  %328 = vmatmul.mubr.bf16.gmra.mrb[0].mxu0 %v131
  %v329 = vpop.f32.mrb[0].mxu0
  %v330 = vadd.f32 %v48, %v329
  %v331 = vpop.f32.mrb[0].mxu0
  %v332 = vadd.f32 %v52, %v331
  %v333 = vpop.f32.mrb[0].mxu0
  %v334 = vadd.f32 %v48, %v333
  %v335 = vpop.f32.mrb[0].mxu0
  %v336 = vadd.f32 %v52, %v335
  %337 = vmatprep.mubr.bf16.mxu0 0
  %338 = vmatmul.mubr.bf16.gmra.mrb[0].mxu0 %v134
  %v339 = vpop.f32.mrb[0].mxu0
  %v340 = vadd.f32 %v48, %v339
  %v341 = vpop.f32.mrb[0].mxu0
  %v342 = vadd.f32 %v52, %v341
  %v343 = vpop.f32.mrb[0].mxu0
  %v344 = vadd.f32 %v48, %v343
  %v345 = vpop.f32.mrb[0].mxu0
  %v346 = vadd.f32 %v52, %v345
  %347 = vmatprep.mubr.bf16.mxu0 0
  %348 = vmatmul.mubr.bf16.gmra.mrb[0].mxu0 %v137
  %v349 = vpop.f32.mrb[0].mxu0
  %v350 = vadd.f32 %v48, %v349
  %v351 = vpop.f32.mrb[0].mxu0
  %v352 = vadd.f32 %v52, %v351
  %v353 = vpop.f32.mrb[0].mxu0
  %v354 = vadd.f32 %v48, %v353
  %v355 = vpop.f32.mrb[0].mxu0
  %v356 = vadd.f32 %v52, %v355
  %357 = vmatprep.mubr.bf16.mxu0 0
  %358 = vmatmul.mubr.bf16.gmra.mrb[0].mxu0 %v140
  %v359 = vpop.f32.mrb[0].mxu0
  %v360 = vadd.f32 %v48, %v359
  %v361 = vpop.f32.mrb[0].mxu0
  %v362 = vadd.f32 %v52, %v361
  %v363 = vpop.f32.mrb[0].mxu0
  %v364 = vadd.f32 %v48, %v363
  %v365 = vpop.f32.mrb[0].mxu0
  %v366 = vadd.f32 %v52, %v365
  %367 = vdwg.mxu0
  %v368 = vmax.f32 %v177, 0.0
  %v369 = vmax.f32 %v179, 0.0
  %v370 = vmax.f32 %v290, 0.0
  %v371 = vmax.f32 %v292, 0.0
  %v372 = vmax.f32 %v181, 0.0
  %v373 = vmax.f32 %v183, 0.0
  %v374 = vmax.f32 %v294, 0.0
  %v375 = vmax.f32 %v296, 0.0
  %v376 = vmax.f32 %v187, 0.0
  %v377 = vmax.f32 %v189, 0.0
  %v378 = vmax.f32 %v300, 0.0
  %v379 = vmax.f32 %v302, 0.0
  %v380 = vmax.f32 %v191, 0.0
  %v381 = vmax.f32 %v193, 0.0
  %v382 = vmax.f32 %v304, 0.0
  %v383 = vmax.f32 %v306, 0.0
  %v384 = vmax.f32 %v197, 0.0
  %v385 = vmax.f32 %v199, 0.0
  %v386 = vmax.f32 %v310, 0.0
  %v387 = vmax.f32 %v312, 0.0
  %v388 = vmax.f32 %v201, 0.0
  %v389 = vmax.f32 %v203, 0.0
  %v390 = vmax.f32 %v314, 0.0
  %v391 = vmax.f32 %v316, 0.0
  %v392 = vmax.f32 %v207, 0.0
  %v393 = vmax.f32 %v209, 0.0
  %v394 = vmax.f32 %v320, 0.0
  %v395 = vmax.f32 %v322, 0.0
  %v396 = vmax.f32 %v211, 0.0
  %v397 = vmax.f32 %v213, 0.0
  %v398 = vmax.f32 %v324, 0.0
  %v399 = vmax.f32 %v326, 0.0
  %v400 = vmax.f32 %v217, 0.0
  %v401 = vmax.f32 %v219, 0.0
  %v402 = vmax.f32 %v330, 0.0
  %v403 = vmax.f32 %v332, 0.0
  %v404 = vmax.f32 %v221, 0.0
  %v405 = vmax.f32 %v223, 0.0
  %v406 = vmax.f32 %v334, 0.0
  %v407 = vmax.f32 %v336, 0.0
  %v408 = vmax.f32 %v227, 0.0
  %v409 = vmax.f32 %v229, 0.0
  %v410 = vmax.f32 %v340, 0.0
  %v411 = vmax.f32 %v342, 0.0
  %v412 = vmax.f32 %v231, 0.0
  %v413 = vmax.f32 %v233, 0.0
  %v414 = vmax.f32 %v344, 0.0
  %v415 = vmax.f32 %v346, 0.0
  %v416 = vmax.f32 %v237, 0.0
  %v417 = vmax.f32 %v239, 0.0
  %v418 = vmax.f32 %v350, 0.0
  %v419 = vmax.f32 %v352, 0.0
  %v420 = vmax.f32 %v241, 0.0
  %v421 = vmax.f32 %v243, 0.0
  %v422 = vmax.f32 %v354, 0.0
  %v423 = vmax.f32 %v356, 0.0
  %v424 = vmax.f32 %v247, 0.0
  %v425 = vmax.f32 %v249, 0.0
  %v426 = vmax.f32 %v360, 0.0
  %v427 = vmax.f32 %v362, 0.0
  %v428 = vmax.f32 %v251, 0.0
  %v429 = vmax.f32 %v253, 0.0
  %v430 = vmax.f32 %v364, 0.0
  %v431 = vmax.f32 %v366, 0.0
  %432 = vst [vmem:[%s3] sm:$0xff] %v368
  %433 = vst [vmem:[%s3 + $0x8] sm:$0xff] %v369
  %434 = vst [vmem:[%s3 + $0x10] sm:$0xff] %v370
  %435 = vst [vmem:[%s3 + $0x18] sm:$0xff] %v371
  %436 = vst [vmem:[%s3 + $0x20] sm:$0xff] %v372
  %437 = vst [vmem:[%s3 + $0x28] sm:$0xff] %v373
  %438 = vst [vmem:[%s3 + $0x30] sm:$0xff] %v374
  %439 = vst [vmem:[%s3 + $0x38] sm:$0xff] %v375
  %440 = vst [vmem:[%s3 + $0x40] sm:$0xff] %v376
  %441 = vst [vmem:[%s3 + $0x48] sm:$0xff] %v377
  %442 = vst [vmem:[%s3 + $0x50] sm:$0xff] %v378
  %443 = vst [vmem:[%s3 + $0x58] sm:$0xff] %v379
  %444 = vst [vmem:[%s3 + $0x60] sm:$0xff] %v380
  %445 = vst [vmem:[%s3 + $0x68] sm:$0xff] %v381
  %446 = vst [vmem:[%s3 + $0x70] sm:$0xff] %v382
  %447 = vst [vmem:[%s3 + $0x78] sm:$0xff] %v383
  %448 = vst [vmem:[%s3 + $0x80] sm:$0xff] %v384
  %449 = vst [vmem:[%s3 + $0x88] sm:$0xff] %v385
  %450 = vst [vmem:[%s3 + $0x90] sm:$0xff] %v386
  %451 = vst [vmem:[%s3 + $0x98] sm:$0xff] %v387
  %452 = vst [vmem:[%s3 + $0xa0] sm:$0xff] %v388
  %453 = vst [vmem:[%s3 + $0xa8] sm:$0xff] %v389
  %454 = vst [vmem:[%s3 + $0xb0] sm:$0xff] %v390
  %455 = vst [vmem:[%s3 + $0xb8] sm:$0xff] %v391
  %456 = vst [vmem:[%s3 + $0xc0] sm:$0xff] %v392
  %457 = vst [vmem:[%s3 + $0xc8] sm:$0xff] %v393
  %458 = vst [vmem:[%s3 + $0xd0] sm:$0xff] %v394
  %459 = vst [vmem:[%s3 + $0xd8] sm:$0xff] %v395
  %460 = vst [vmem:[%s3 + $0xe0] sm:$0xff] %v396
  %461 = vst [vmem:[%s3 + $0xe8] sm:$0xff] %v397
  %462 = vst [vmem:[%s3 + $0xf0] sm:$0xff] %v398
  %463 = vst [vmem:[%s3 + $0xf8] sm:$0xff] %v399
  %464 = vst [vmem:[%s3 + $0x100] sm:$0xff] %v400
  %465 = vst [vmem:[%s3 + $0x108] sm:$0xff] %v401
  %466 = vst [vmem:[%s3 + $0x110] sm:$0xff] %v402
  %467 = vst [vmem:[%s3 + $0x118] sm:$0xff] %v403
  %468 = vst [vmem:[%s3 + $0x120] sm:$0xff] %v404
  %469 = vst [vmem:[%s3 + $0x128] sm:$0xff] %v405
  %470 = vst [vmem:[%s3 + $0x130] sm:$0xff] %v406
  %471 = vst [vmem:[%s3 + $0x138] sm:$0xff] %v407
  %472 = vst [vmem:[%s3 + $0x140] sm:$0xff] %v408
  %473 = vst [vmem:[%s3 + $0x148] sm:$0xff] %v409
  %474 = vst [vmem:[%s3 + $0x150] sm:$0xff] %v410
  %475 = vst [vmem:[%s3 + $0x158] sm:$0xff] %v411
  %476 = vst [vmem:[%s3 + $0x160] sm:$0xff] %v412
  %477 = vst [vmem:[%s3 + $0x168] sm:$0xff] %v413
  %478 = vst [vmem:[%s3 + $0x170] sm:$0xff] %v414
  %479 = vst [vmem:[%s3 + $0x178] sm:$0xff] %v415
  %480 = vst [vmem:[%s3 + $0x180] sm:$0xff] %v416
  %481 = vst [vmem:[%s3 + $0x188] sm:$0xff] %v417
  %482 = vst [vmem:[%s3 + $0x190] sm:$0xff] %v418
  %483 = vst [vmem:[%s3 + $0x198] sm:$0xff] %v419
  %484 = vst [vmem:[%s3 + $0x1a0] sm:$0xff] %v420
  %485 = vst [vmem:[%s3 + $0x1a8] sm:$0xff] %v421
  %486 = vst [vmem:[%s3 + $0x1b0] sm:$0xff] %v422
  %487 = vst [vmem:[%s3 + $0x1b8] sm:$0xff] %v423
  %488 = vst [vmem:[%s3 + $0x1c0] sm:$0xff] %v424
  %489 = vst [vmem:[%s3 + $0x1c8] sm:$0xff] %v425
  %490 = vst [vmem:[%s3 + $0x1d0] sm:$0xff] %v426
  %491 = vst [vmem:[%s3 + $0x1d8] sm:$0xff] %v427
  %492 = vst [vmem:[%s3 + $0x1e0] sm:$0xff] %v428
  %493 = vst [vmem:[%s3 + $0x1e8] sm:$0xff] %v429
  %494 = vst [vmem:[%s3 + $0x1f0] sm:$0xff] %v430
  %495 = vst [vmem:[%s3 + $0x1f8] sm:$0xff] %v431
  // Predicated region
  $region14: #{_lambda_.8} parent=0 // pred_check
    _
  $region15: #{_lambda_.8} parent=0 // pred_check_branch
    %497 = sbr.rel (0) target = $region17
  $region16: #{_lambda_.8} parent=0 // pred_region
    _
  $region17: #{_lambda_.8} parent=0 // pred_fallthru
    _
  // Predicated region
  $region18: #{_lambda_.8} parent=0 // pred_check
    _
  $region19: #{_lambda_.8} parent=0 // pred_check_branch
    %499 = sbr.rel (0) target = $region21
  $region20: #{_lambda_.8} parent=0 // pred_region
    _
  $region21: #{_lambda_.8} parent=0 // pred_fallthru
    _

// kernel: _lambda_.11
$region0: #{_lambda_.11}
  #allocation0 [shape = 'u32[]', space=smem, size = 0x4, offset = 0x4, fixed_abs, tag = 'smem constant byte address 0x4 - core index']
  #allocation1 [shape = 'u32[144,128]{1,0:T(1,128)}', space=vmem, size = 0x12000, scoped, tag = 'internal scratch']
  #allocation2 [shape = 'f32[16,128]{1,0:T(8,128)}', space=vmem, size = 0x2000, scoped, tag = 'scratch operand']
  %s0 = inlined_call_operand.vmem [shape: bf16[224,128], index: 0, kind: input, shape index: {}]
  %s1 = inlined_call_operand.vmem [shape: bf16[896,128], index: 1, kind: input, shape index: {}]
  %s2 = inlined_call_operand.vmem [shape: f32[1,128], index: 2, kind: input, shape index: {}]
  %s3 = inlined_call_operand.vmem [shape: bf16[128,128], index: 3, kind: output, shape index: {}]
  %s4 = sld [smem:[#allocation0]]
  $region53: #{_lambda_.11} parent=0
    _
  %s6 = ssub.s32 1, %s4
  %s7 = scalar_select 0, %s6, %s4
  loop: start=0, step=1, limit=58
  $region2: #{_lambda_.11} parent=0 // loop_pre_header
    _
  $region3: #{_lambda_.11} parent=0 // loop_header
    %s9 = sphi 0, %s13
    %p10 = scmp.ge.s32.totalorder %s9, 58
    %s16 = sphi 0, %s28
    %s17 = sphi 0, %s24
    %s18 = sphi 0, %s16
    %s19 = sphi 0, %s17
    %s20 = sphi 0, %s18
    %s21 = sphi 0, %s19
    %s33 = sphi 0, %s35
    %s36 = sphi 0, %s33
    %s37 = sphi 0, %s36
    %s53 = sphi 0, %s37
    %s59 = sphi 0, %s61
    %s62 = sphi 0, %s59
    %s63 = sphi 0, %s62
    %s79 = sphi 0, %s63
    %s83 = sphi 0, %s83
    %s85 = sphi 0, %s83
    %s86 = sphi 0, %s85
    %s100 = sphi 0, %s86
    %s106 = sphi 0, %s108
    %s109 = sphi 0, %s106
    %s110 = sphi 0, %s109
    %s126 = sphi 0, %s110
  $region4: #{_lambda_.11} parent=0 // loop_header_branch
    %12 = sbr.rel (%p10) target = $region8
  $region5: #{_lambda_.11} parent=0 // loop_body
    %s14 = ssub.s32 %s9, 1
    %s15 = ssub.s32 %s9, 2
    %s22 = sadd.s32 1, %s17
    %p23 = scmp.ge.s32.totalorder %s22, 7
    %s24 = scalar_select %p23, 0, %s22
    %s25 = sadd.s32 1, %s16
    %s26 = scalar_select %p23, %s25, %s16
    %p27 = scmp.ge.s32.totalorder %s26, 8
    %s28 = scalar_select %p27, 0, %s26
    %s29 = sadd.s32 %s16, %s17
    %s30 = sadd.s32 %s28, %s24
    %s31 = ssub.s32 %s29, %s30
    %p32 = scmp.eq.s32.totalorder %s31, 0
    %s34 = sadd.s32 %s33, 1
    %s35 = scalar_select %p32, %s33, %s34
    %p38 = pneg %p32
    %p39 = scmp.eq.s32.totalorder %s9, 55
    %p40 = por %p38, %p39
    %p41 = scmp.ne.s32.totalorder %s33, %s36
    %p42 = scmp.eq.s32.totalorder %s9, 0
    %p43 = por %p41, %p42
    %p44 = scmp.ne.s32.totalorder %s33, %s36
    %p45 = scmp.eq.s32.totalorder %s14, 55
    %p46 = por %p44, %p45
    %p47 = scmp.ne.s32.totalorder %s36, %s37
    %p48 = scmp.eq.s32.totalorder %s14, 0
    %p49 = por %p47, %p48
    %p50 = scmp.ne.s32.totalorder %s36, %s37
    %p51 = scmp.eq.s32.totalorder %s15, 55
    %p52 = por %p50, %p51
    %p54 = scmp.ne.s32.totalorder %s37, %s53
    %p55 = scmp.eq.s32.totalorder %s15, 0
    %p56 = por %p54, %p55
    %s57 = ssub.s32 %s17, %s24
    %p58 = scmp.eq.s32.totalorder %s57, 0
    %s60 = sadd.s32 %s59, 1
    %s61 = scalar_select %p58, %s59, %s60
    %p64 = pneg %p58
    %p65 = scmp.eq.s32.totalorder %s9, 55
    %p66 = por %p64, %p65
    %p67 = scmp.ne.s32.totalorder %s59, %s62
    %p68 = scmp.eq.s32.totalorder %s9, 0
    %p69 = por %p67, %p68
    %p70 = scmp.ne.s32.totalorder %s59, %s62
    %p71 = scmp.eq.s32.totalorder %s14, 55
    %p72 = por %p70, %p71
    %p73 = scmp.ne.s32.totalorder %s62, %s63
    %p74 = scmp.eq.s32.totalorder %s14, 0
    %p75 = por %p73, %p74
    %p76 = scmp.ne.s32.totalorder %s62, %s63
    %p77 = scmp.eq.s32.totalorder %s15, 55
    %p78 = por %p76, %p77
    %p80 = scmp.ne.s32.totalorder %s63, %s79
    %p81 = scmp.eq.s32.totalorder %s15, 0
    %p82 = por %p80, %p81
    %s84 = sadd.s32 %s83, 1
    %p87 = scmp.eq.s32.totalorder %s9, 55
    %p88 = scmp.ne.s32.totalorder %s83, %s85
    %p89 = scmp.eq.s32.totalorder %s9, 0
    %p90 = por %p88, %p89
    %p91 = scmp.ne.s32.totalorder %s83, %s85
    %p92 = scmp.eq.s32.totalorder %s14, 55
    %p93 = por %p91, %p92
    %p94 = scmp.ne.s32.totalorder %s85, %s86
    %p95 = scmp.eq.s32.totalorder %s14, 0
    %p96 = por %p94, %p95
    %p97 = scmp.ne.s32.totalorder %s85, %s86
    %p98 = scmp.eq.s32.totalorder %s15, 55
    %p99 = por %p97, %p98
    %p101 = scmp.ne.s32.totalorder %s86, %s100
    %p102 = scmp.eq.s32.totalorder %s15, 0
    %p103 = por %p101, %p102
    %s104 = ssub.s32 %s16, %s28
    %p105 = scmp.eq.s32.totalorder %s104, 0
    %s107 = sadd.s32 %s106, 1
    %s108 = scalar_select %p105, %s106, %s107
    %p111 = pneg %p105
    %p112 = scmp.eq.s32.totalorder %s9, 55
    %p113 = por %p111, %p112
    %p114 = scmp.ne.s32.totalorder %s106, %s109
    %p115 = scmp.eq.s32.totalorder %s9, 0
    %p116 = por %p114, %p115
    %p117 = scmp.ne.s32.totalorder %s106, %s109
    %p118 = scmp.eq.s32.totalorder %s14, 55
    %p119 = por %p117, %p118
    %p120 = scmp.ne.s32.totalorder %s109, %s110
    %p121 = scmp.eq.s32.totalorder %s14, 0
    %p122 = por %p120, %p121
    %p123 = scmp.ne.s32.totalorder %s109, %s110
    %p124 = scmp.eq.s32.totalorder %s15, 55
    %p125 = por %p123, %p124
    %p127 = scmp.ne.s32.totalorder %s110, %s126
    %p128 = scmp.eq.s32.totalorder %s15, 0
    %p129 = por %p127, %p128
    %p130 = scmp.le.s32.totalorder 1, %s9
    %p131 = scmp.lt.s32.totalorder %s9, 57
    %p132 = pnand %p130, %p131
    %p133 = pneg %p132
    // Predicated region
    $region9: #{_lambda_.11} parent=5 // pred_check
      _
    $region10: #{_lambda_.11} parent=5 // pred_check_branch
      %135 = sbr.rel (%p132) target = $region12
    $region11: #{_lambda_.11} parent=5 // pred_region
      %s136 = ssub.s32 %s9, 1
      // Predicated region
      $region13: #{_lambda_.11} parent=11 // pred_check
        %p137 = pneg %p96
      $region14: #{_lambda_.11} parent=11 // pred_check_branch
        %139 = sbr.rel (%p137) target = $region16
      $region15: #{_lambda_.11} parent=11 // pred_region
        _
      $region16: #{_lambda_.11} parent=11 // pred_fallthru
        _
    $region12: #{_lambda_.11} parent=5 // pred_fallthru
      _
    %p140 = scmp.lt.s32.totalorder %s9, 56
    // Predicated region
    $region17: #{_lambda_.11} parent=5 // pred_check
      %p141 = pneg %p140
    $region18: #{_lambda_.11} parent=5 // pred_check_branch
      %143 = sbr.rel (%p141) target = $region20
    $region19: #{_lambda_.11} parent=5 // pred_region
      // Predicated region
      $region21: #{_lambda_.11} parent=19 // pred_check
        %p144 = pneg %p43
      $region22: #{_lambda_.11} parent=19 // pred_check_branch
        %146 = sbr.rel (%p144) target = $region24
      $region23: #{_lambda_.11} parent=19 // pred_region
        %s147 = sadd.s32 %s16, %s17
        %s148 = smul.u32 2, %s147
        %p149 = scmp.lt.s32.totalorder %s148, 27
        %s150 = scalar_select %p149, %s148, 27
        %s151 = smul.addr %s150, 4
        %s152 = scalar_lea.vmem %s0, %s151
        %s153 = sadd.s32 %s16, %s17
        %s154 = smul.u32 2, %s153
      $region24: #{_lambda_.11} parent=19 // pred_fallthru
        _
      // Predicated region
      $region25: #{_lambda_.11} parent=19 // pred_check
        %p155 = pneg %p69
      $region26: #{_lambda_.11} parent=19 // pred_check_branch
        %157 = sbr.rel (%p155) target = $region28
      $region27: #{_lambda_.11} parent=19 // pred_region
        %s158 = smul.u32 16, %s17
        %p159 = scmp.lt.s32.totalorder %s158, 111
        %s160 = scalar_select %p159, %s158, 111
        %s161 = smul.addr %s160, 4
        %s162 = scalar_lea.vmem %s1, %s161
        %s163 = smul.u32 16, %s17
      $region28: #{_lambda_.11} parent=19 // pred_fallthru
        _
    $region20: #{_lambda_.11} parent=5 // pred_fallthru
      _
    %p164 = scmp.le.s32.totalorder 1, %s9
    %p165 = scmp.lt.s32.totalorder %s9, 57
    %p166 = pnand %p164, %p165
    %p167 = pneg %p166
    // Predicated region
    $region29: #{_lambda_.11} parent=5 // pred_check
      _
    $region30: #{_lambda_.11} parent=5 // pred_check_branch
      %169 = sbr.rel (%p166) target = $region32
    $region31: #{_lambda_.11} parent=5 // pred_region
      %s170 = ssub.s32 %s9, 1
      %s171 = sadd.s32 %s18, %s19
      %s172 = smul.u32 2, %s171
      %p173 = scmp.lt.s32.totalorder %s172, 27
      %s174 = scalar_select %p173, %s172, 27
      %s175 = smul.addr %s174, 4
      %s176 = scalar_lea.vmem %s0, %s175
      %p177 = pneg %p49
      %p178 = pneg %p46
      %s179 = smul.u32 16, %s19
      %p180 = scmp.lt.s32.totalorder %s179, 111
      %s181 = scalar_select %p180, %s179, 111
      %s182 = smul.addr %s181, 4
      %s183 = scalar_lea.vmem %s1, %s182
      %p184 = pneg %p75
      %p185 = pneg %p72
      %p186 = pneg %p96
      %p187 = pneg %p93
      %p188 = pneg %p122
      %p189 = pneg %p119
      %s190 = smul.u32 2, %s18
      %p191 = scmp.lt.s32.totalorder %s190, 15
      %s192 = scalar_select %p191, %s190, 15
      %s193 = smul.addr %s192, 4
      %s194 = scalar_lea.vmem %s3, %s193
      %s195 = sadd.s32 %s18, %s19
      %s196 = smul.u32 2, %s195
      %p197 = scmp.lt.s32.totalorder %s196, 27
      %s198 = scalar_select %p197, %s196, 27
      %s199 = smul.addr %s198, 4
      %s200 = scalar_lea.vmem %s0, %s199
      %s201 = sadd.s32 %s18, %s19
      %s202 = smul.u32 2, %s201
      %s203 = smul.u32 16, %s19
      %p204 = scmp.lt.s32.totalorder %s203, 111
      %s205 = scalar_select %p204, %s203, 111
      %s206 = smul.addr %s205, 4
      %s207 = scalar_lea.vmem %s1, %s206
      %s208 = smul.u32 16, %s19
      %s209 = smul.u32 2, %s18
      %p210 = scmp.lt.s32.totalorder %s209, 15
      %s211 = scalar_select %p210, %s209, 15
      %s212 = smul.addr %s211, 4
      %s213 = scalar_lea.vmem %s3, %s212
      %s214 = smul.u32 2, %s18
      %p216 = scmp.eq.s32.totalorder %s19, 0
      // Predicated region
      $region33: #{_lambda_.11} parent=31 // pred_check
        %p217 = pneg %p216
      $region34: #{_lambda_.11} parent=31 // pred_check_branch
        %219 = sbr.rel (%p217) target = $region36
      $region35: #{_lambda_.11} parent=31 // pred_region
        %220 = vst [vmem:[#allocation2] sm:$0xff] 0.0
        %221 = vst [vmem:[#allocation2 + $0x8] sm:$0xff] 0.0
      $region36: #{_lambda_.11} parent=31 // pred_fallthru
        _
      %v222 = vld [vmem:[#allocation2] sm:$0xff]
      %v223 = vld [vmem:[#allocation2 + $0x8] sm:$0xff]
      %v224 = vld [vmem:[%s200] sm:$0xf]
      %v225 = vld [vmem:[%s200 + $0x4] sm:$0xf]
      %v226 = vld [vmem:[%s207] sm:$0xf]
      %v227 = vld [vmem:[%s207 + $0x4] sm:$0xf]
      %v228 = vld [vmem:[%s207 + $0x8] sm:$0xf]
      %v229 = vld [vmem:[%s207 + $0xc] sm:$0xf]
      %v230 = vld [vmem:[%s207 + $0x10] sm:$0xf]
      %v231 = vld [vmem:[%s207 + $0x14] sm:$0xf]
      %v232 = vld [vmem:[%s207 + $0x18] sm:$0xf]
      %v233 = vld [vmem:[%s207 + $0x1c] sm:$0xf]
      %v234 = vld [vmem:[%s207 + $0x20] sm:$0xf]
      %v235 = vld [vmem:[%s207 + $0x24] sm:$0xf]
      %v236 = vld [vmem:[%s207 + $0x28] sm:$0xf]
      %v237 = vld [vmem:[%s207 + $0x2c] sm:$0xf]
      %v238 = vld [vmem:[%s207 + $0x30] sm:$0xf]
      %v239 = vld [vmem:[%s207 + $0x34] sm:$0xf]
      %v240 = vld [vmem:[%s207 + $0x38] sm:$0xf]
      %v241 = vld [vmem:[%s207 + $0x3c] sm:$0xf]
      %v244 = vunpack.c.l.b16 %v224
      %v245 = vunpack.c.l.b16 %v225
      %v246 = vpack.c.b16 %v245, %v244
      %v264 = vunpack.c.l.b16 %v226
      %v265 = vunpack.c.l.b16 %v227
      %v266 = vunpack.c.l.b16 %v228
      %v267 = vunpack.c.l.b16 %v229
      %v268 = vunpack.c.l.b16 %v230
      %v269 = vunpack.c.l.b16 %v231
      %v270 = vunpack.c.l.b16 %v232
      %v271 = vunpack.c.l.b16 %v233
      %v272 = vunpack.c.l.b16 %v234
      %v273 = vunpack.c.l.b16 %v235
      %v274 = vunpack.c.l.b16 %v236
      %v275 = vunpack.c.l.b16 %v237
      %v276 = vunpack.c.l.b16 %v238
      %v277 = vunpack.c.l.b16 %v239
      %v278 = vunpack.c.l.b16 %v240
      %v279 = vunpack.c.l.b16 %v241
      %v280 = vpack.c.b16 %v265, %v264
      %v281 = vpack.c.b16 %v267, %v266
      %v282 = vpack.c.b16 %v269, %v268
      %v283 = vpack.c.b16 %v271, %v270
      %v284 = vpack.c.b16 %v273, %v272
      %v285 = vpack.c.b16 %v275, %v274
      %v286 = vpack.c.b16 %v277, %v276
      %v287 = vpack.c.b16 %v279, %v278
      %296 = vmatprep.subr.bf16.mxu0 0
      %297 = vmatpush1.bf16.msra.mxu0 %v280
      %298 = vmatprep.subr.bf16.mxu0 0
      %299 = vmatpush1.bf16.msra.mxu0 %v281
      %300 = vmatprep.subr.bf16.mxu0 0
      %301 = vmatpush1.bf16.msra.mxu0 %v282
      %302 = vmatprep.subr.bf16.mxu0 0
      %303 = vmatpush1.bf16.msra.mxu0 %v283
      %304 = vmatprep.subr.bf16.mxu0 0
      %305 = vmatpush1.bf16.msra.mxu0 %v284
      %306 = vmatprep.subr.bf16.mxu0 0
      %307 = vmatpush1.bf16.msra.mxu0 %v285
      %308 = vmatprep.subr.bf16.mxu0 0
      %309 = vmatpush1.bf16.msra.mxu0 %v286
      %310 = vmatprep.subr.bf16.mxu0 0
      %311 = vmatpush1.bf16.msra.mxu0 %v287
      %312 = vmatprep.subr.bf16.mxu0 0
      %313 = vmatpush1.bf16.msra.mxu0 0
      %314 = vmatprep.subr.bf16.mxu0 0
      %315 = vmatpush1.bf16.msra.mxu0 0
      %316 = vmatprep.subr.bf16.mxu0 0
      %317 = vmatpush1.bf16.msra.mxu0 0
      %318 = vmatprep.subr.bf16.mxu0 0
      %319 = vmatpush1.bf16.msra.mxu0 0
      %320 = vmatprep.subr.bf16.mxu0 0
      %321 = vmatpush1.bf16.msra.mxu0 0
      %322 = vmatprep.subr.bf16.mxu0 0
      %323 = vmatpush1.bf16.msra.mxu0 0
      %324 = vmatprep.subr.bf16.mxu0 0
      %325 = vmatpush1.bf16.msra.mxu0 0
      %326 = vmatprep.subr.bf16.mxu0 0
      %327 = vmatpush1.bf16.msra.mxu0 0
      %328 = vmatprep.mubr.bf16.mxu0 0
      %329 = vmatmul.mubr.bf16.gmra.mrb[0].mxu0 %v246
      %v330 = vpop.f32.mrb[0].mxu0
      %v331 = vadd.f32 0.0, %v330
      %v332 = vpop.f32.mrb[0].mxu0
      %v333 = vpop.f32.mrb[0].mxu0
      %v334 = vadd.f32 0.0, %v333
      %v335 = vpop.f32.mrb[0].mxu0
      %336 = vdwg.mxu0
      %v337 = vadd.f32 %v222, %v331
      %v338 = vadd.f32 %v223, %v334
      %339 = vst [vmem:[#allocation2] sm:$0xff] %v337
      %340 = vst [vmem:[#allocation2 + $0x8] sm:$0xff] %v338
      %p341 = scmp.eq.s32.totalorder %s19, 6
      // Predicated region
      $region37: #{_lambda_.11} parent=31 // pred_check
        %p342 = pneg %p341
      $region38: #{_lambda_.11} parent=31 // pred_check_branch
        %344 = sbr.rel (%p342) target = $region40
      $region39: #{_lambda_.11} parent=31 // pred_region
        %v345 = vld [vmem:[#allocation2] sm:$0xff]
        %v346 = vld [vmem:[#allocation2 + $0x8] sm:$0xff]
        %v347 = vld [vmem:[%s2] sm:$0x1]
        %v349 = vlaneseq
        %v350 = vshrl.u32 %v349, 7
        %v351 = vsub.s32 0, %v350
        %v352 = vrot.slane %v347, %v351
        %v354 = vadd.f32 %v345, %v352
        %v355 = vadd.f32 %v346, %v352
        %v356 = vmax.f32 %v354, 0.0
        %v357 = vmax.f32 %v355, 0.0
        %v358 = vpack.c.bf16 %v357, %v356
        %v360 = vunpack.c.l.b16 %v358
        %v361 = vunpack.c.h.b16 %v358
        %v362 = vpack.c.b16 %v360, %v360
        %v363 = vpack.c.b16 %v361, %v361
        %366 = vst [vmem:[%s213] sm:$0xf] %v362
        %367 = vst [vmem:[%s213 + $0x4] sm:$0xf] %v363
      $region40: #{_lambda_.11} parent=31 // pred_fallthru
        _
      %s368 = smul.u32 2, %s18
      %p369 = scmp.lt.s32.totalorder %s368, 15
      %s370 = scalar_select %p369, %s368, 15
      %s371 = smul.addr %s370, 4
      %s372 = scalar_lea.vmem %s3, %s371
      // Predicated region
      $region41: #{_lambda_.11} parent=31 // pred_check
        %p373 = pneg %p119
      $region42: #{_lambda_.11} parent=31 // pred_check_branch
        %375 = sbr.rel (%p373) target = $region44
      $region43: #{_lambda_.11} parent=31 // pred_region
        %s376 = smul.u32 2, %s18
      $region44: #{_lambda_.11} parent=31 // pred_fallthru
        _
    $region32: #{_lambda_.11} parent=5 // pred_fallthru
      _
    %p377 = scmp.le.s32.totalorder 2, %s9
    // Predicated region
    $region45: #{_lambda_.11} parent=5 // pred_check
      %p378 = pneg %p377
    $region46: #{_lambda_.11} parent=5 // pred_check_branch
      %380 = sbr.rel (%p378) target = $region48
    $region47: #{_lambda_.11} parent=5 // pred_region
      %s381 = ssub.s32 %s9, 2
      // Predicated region
      $region49: #{_lambda_.11} parent=47 // pred_check
        %p382 = pneg %p125
      $region50: #{_lambda_.11} parent=47 // pred_check_branch
        %384 = sbr.rel (%p382) target = $region52
      $region51: #{_lambda_.11} parent=47 // pred_region
        %s385 = smul.u32 2, %s20
        %p386 = scmp.lt.s32.totalorder %s385, 15
        %s387 = scalar_select %p386, %s385, 15
        %s388 = smul.addr %s387, 4
        %s389 = scalar_lea.vmem %s3, %s388
      $region52: #{_lambda_.11} parent=47 // pred_fallthru
        _
    $region48: #{_lambda_.11} parent=5 // pred_fallthru
      _
  $region6: #{_lambda_.11} parent=0 // loop_footer
    %s13 = sadd.s32 1, %s9
  $region7: #{_lambda_.11} parent=0 // loop_footer_branch
    %8 = sbr.rel target = $region3
  $region8: #{_lambda_.11} parent=0 // loop_exit
    _

// kernel: _lambda_.10
$region0: #{_lambda_.10}
  #allocation0 [shape = 'u32[]', space=smem, size = 0x4, offset = 0x4, fixed_abs, tag = 'smem constant byte address 0x4 - core index']
  #allocation1 [shape = 'u32[144,128]{1,0:T(1,128)}', space=vmem, size = 0x12000, scoped, tag = 'internal scratch']
  #allocation2 [shape = 'f32[16,256]{1,0:T(8,128)}', space=vmem, size = 0x4000, scoped, tag = 'scratch operand']
  %s0 = inlined_call_operand.vmem [shape: bf16[224,128], index: 0, kind: input, shape index: {}]
  %s1 = inlined_call_operand.vmem [shape: bf16[896,256], index: 1, kind: input, shape index: {}]
  %s2 = inlined_call_operand.vmem [shape: f32[1,256], index: 2, kind: input, shape index: {}]
  %s3 = inlined_call_operand.vmem [shape: f32[128,256], index: 3, kind: output, shape index: {}]
  %s4 = sld [smem:[#allocation0]]
  $region53: #{_lambda_.10} parent=0
    _
  %s6 = ssub.s32 1, %s4
  %s7 = scalar_select 0, %s6, %s4
  loop: start=0, step=1, limit=58
  $region2: #{_lambda_.10} parent=0 // loop_pre_header
    _
  $region3: #{_lambda_.10} parent=0 // loop_header
    %s9 = sphi 0, %s13
    %p10 = scmp.ge.s32.totalorder %s9, 58
    %s16 = sphi 0, %s28
    %s17 = sphi 0, %s24
    %s18 = sphi 0, %s16
    %s19 = sphi 0, %s17
    %s20 = sphi 0, %s18
    %s21 = sphi 0, %s19
    %s33 = sphi 0, %s35
    %s36 = sphi 0, %s33
    %s37 = sphi 0, %s36
    %s53 = sphi 0, %s37
    %s59 = sphi 0, %s61
    %s62 = sphi 0, %s59
    %s63 = sphi 0, %s62
    %s79 = sphi 0, %s63
    %s83 = sphi 0, %s83
    %s85 = sphi 0, %s83
    %s86 = sphi 0, %s85
    %s100 = sphi 0, %s86
    %s106 = sphi 0, %s108
    %s109 = sphi 0, %s106
    %s110 = sphi 0, %s109
    %s126 = sphi 0, %s110
  $region4: #{_lambda_.10} parent=0 // loop_header_branch
    %12 = sbr.rel (%p10) target = $region8
  $region5: #{_lambda_.10} parent=0 // loop_body
    %s14 = ssub.s32 %s9, 1
    %s15 = ssub.s32 %s9, 2
    %s22 = sadd.s32 1, %s17
    %p23 = scmp.ge.s32.totalorder %s22, 7
    %s24 = scalar_select %p23, 0, %s22
    %s25 = sadd.s32 1, %s16
    %s26 = scalar_select %p23, %s25, %s16
    %p27 = scmp.ge.s32.totalorder %s26, 8
    %s28 = scalar_select %p27, 0, %s26
    %s29 = sadd.s32 %s16, %s17
    %s30 = sadd.s32 %s28, %s24
    %s31 = ssub.s32 %s29, %s30
    %p32 = scmp.eq.s32.totalorder %s31, 0
    %s34 = sadd.s32 %s33, 1
    %s35 = scalar_select %p32, %s33, %s34
    %p38 = pneg %p32
    %p39 = scmp.eq.s32.totalorder %s9, 55
    %p40 = por %p38, %p39
    %p41 = scmp.ne.s32.totalorder %s33, %s36
    %p42 = scmp.eq.s32.totalorder %s9, 0
    %p43 = por %p41, %p42
    %p44 = scmp.ne.s32.totalorder %s33, %s36
    %p45 = scmp.eq.s32.totalorder %s14, 55
    %p46 = por %p44, %p45
    %p47 = scmp.ne.s32.totalorder %s36, %s37
    %p48 = scmp.eq.s32.totalorder %s14, 0
    %p49 = por %p47, %p48
    %p50 = scmp.ne.s32.totalorder %s36, %s37
    %p51 = scmp.eq.s32.totalorder %s15, 55
    %p52 = por %p50, %p51
    %p54 = scmp.ne.s32.totalorder %s37, %s53
    %p55 = scmp.eq.s32.totalorder %s15, 0
    %p56 = por %p54, %p55
    %s57 = ssub.s32 %s17, %s24
    %p58 = scmp.eq.s32.totalorder %s57, 0
    %s60 = sadd.s32 %s59, 1
    %s61 = scalar_select %p58, %s59, %s60
    %p64 = pneg %p58
    %p65 = scmp.eq.s32.totalorder %s9, 55
    %p66 = por %p64, %p65
    %p67 = scmp.ne.s32.totalorder %s59, %s62
    %p68 = scmp.eq.s32.totalorder %s9, 0
    %p69 = por %p67, %p68
    %p70 = scmp.ne.s32.totalorder %s59, %s62
    %p71 = scmp.eq.s32.totalorder %s14, 55
    %p72 = por %p70, %p71
    %p73 = scmp.ne.s32.totalorder %s62, %s63
    %p74 = scmp.eq.s32.totalorder %s14, 0
    %p75 = por %p73, %p74
    %p76 = scmp.ne.s32.totalorder %s62, %s63
    %p77 = scmp.eq.s32.totalorder %s15, 55
    %p78 = por %p76, %p77
    %p80 = scmp.ne.s32.totalorder %s63, %s79
    %p81 = scmp.eq.s32.totalorder %s15, 0
    %p82 = por %p80, %p81
    %s84 = sadd.s32 %s83, 1
    %p87 = scmp.eq.s32.totalorder %s9, 55
    %p88 = scmp.ne.s32.totalorder %s83, %s85
    %p89 = scmp.eq.s32.totalorder %s9, 0
    %p90 = por %p88, %p89
    %p91 = scmp.ne.s32.totalorder %s83, %s85
    %p92 = scmp.eq.s32.totalorder %s14, 55
    %p93 = por %p91, %p92
    %p94 = scmp.ne.s32.totalorder %s85, %s86
    %p95 = scmp.eq.s32.totalorder %s14, 0
    %p96 = por %p94, %p95
    %p97 = scmp.ne.s32.totalorder %s85, %s86
    %p98 = scmp.eq.s32.totalorder %s15, 55
    %p99 = por %p97, %p98
    %p101 = scmp.ne.s32.totalorder %s86, %s100
    %p102 = scmp.eq.s32.totalorder %s15, 0
    %p103 = por %p101, %p102
    %s104 = ssub.s32 %s16, %s28
    %p105 = scmp.eq.s32.totalorder %s104, 0
    %s107 = sadd.s32 %s106, 1
    %s108 = scalar_select %p105, %s106, %s107
    %p111 = pneg %p105
    %p112 = scmp.eq.s32.totalorder %s9, 55
    %p113 = por %p111, %p112
    %p114 = scmp.ne.s32.totalorder %s106, %s109
    %p115 = scmp.eq.s32.totalorder %s9, 0
    %p116 = por %p114, %p115
    %p117 = scmp.ne.s32.totalorder %s106, %s109
    %p118 = scmp.eq.s32.totalorder %s14, 55
    %p119 = por %p117, %p118
    %p120 = scmp.ne.s32.totalorder %s109, %s110
    %p121 = scmp.eq.s32.totalorder %s14, 0
    %p122 = por %p120, %p121
    %p123 = scmp.ne.s32.totalorder %s109, %s110
    %p124 = scmp.eq.s32.totalorder %s15, 55
    %p125 = por %p123, %p124
    %p127 = scmp.ne.s32.totalorder %s110, %s126
    %p128 = scmp.eq.s32.totalorder %s15, 0
    %p129 = por %p127, %p128
    %p130 = scmp.le.s32.totalorder 1, %s9
    %p131 = scmp.lt.s32.totalorder %s9, 57
    %p132 = pnand %p130, %p131
    %p133 = pneg %p132
    // Predicated region
    $region9: #{_lambda_.10} parent=5 // pred_check
      _
    $region10: #{_lambda_.10} parent=5 // pred_check_branch
      %135 = sbr.rel (%p132) target = $region12
    $region11: #{_lambda_.10} parent=5 // pred_region
      %s136 = ssub.s32 %s9, 1
      // Predicated region
      $region13: #{_lambda_.10} parent=11 // pred_check
        %p137 = pneg %p96
      $region14: #{_lambda_.10} parent=11 // pred_check_branch
        %139 = sbr.rel (%p137) target = $region16
      $region15: #{_lambda_.10} parent=11 // pred_region
        _
      $region16: #{_lambda_.10} parent=11 // pred_fallthru
        _
    $region12: #{_lambda_.10} parent=5 // pred_fallthru
      _
    %p140 = scmp.lt.s32.totalorder %s9, 56
    // Predicated region
    $region17: #{_lambda_.10} parent=5 // pred_check
      %p141 = pneg %p140
    $region18: #{_lambda_.10} parent=5 // pred_check_branch
      %143 = sbr.rel (%p141) target = $region20
    $region19: #{_lambda_.10} parent=5 // pred_region
      // Predicated region
      $region21: #{_lambda_.10} parent=19 // pred_check
        %p144 = pneg %p43
      $region22: #{_lambda_.10} parent=19 // pred_check_branch
        %146 = sbr.rel (%p144) target = $region24
      $region23: #{_lambda_.10} parent=19 // pred_region
        %s147 = sadd.s32 %s16, %s17
        %s148 = smul.u32 2, %s147
        %p149 = scmp.lt.s32.totalorder %s148, 27
        %s150 = scalar_select %p149, %s148, 27
        %s151 = smul.addr %s150, 4
        %s152 = scalar_lea.vmem %s0, %s151
        %s153 = sadd.s32 %s16, %s17
        %s154 = smul.u32 2, %s153
      $region24: #{_lambda_.10} parent=19 // pred_fallthru
        _
      // Predicated region
      $region25: #{_lambda_.10} parent=19 // pred_check
        %p155 = pneg %p69
      $region26: #{_lambda_.10} parent=19 // pred_check_branch
        %157 = sbr.rel (%p155) target = $region28
      $region27: #{_lambda_.10} parent=19 // pred_region
        %s158 = smul.u32 16, %s17
        %p159 = scmp.lt.s32.totalorder %s158, 111
        %s160 = scalar_select %p159, %s158, 111
        %s161 = smul.addr %s160, 2
        %s162 = smul.addr %s161, 4
        %s163 = scalar_lea.vmem %s1, %s162
        %s164 = smul.u32 16, %s17
      $region28: #{_lambda_.10} parent=19 // pred_fallthru
        _
    $region20: #{_lambda_.10} parent=5 // pred_fallthru
      _
    %p165 = scmp.le.s32.totalorder 1, %s9
    %p166 = scmp.lt.s32.totalorder %s9, 57
    %p167 = pnand %p165, %p166
    %p168 = pneg %p167
    // Predicated region
    $region29: #{_lambda_.10} parent=5 // pred_check
      _
    $region30: #{_lambda_.10} parent=5 // pred_check_branch
      %170 = sbr.rel (%p167) target = $region32
    $region31: #{_lambda_.10} parent=5 // pred_region
      %s171 = ssub.s32 %s9, 1
      %s172 = sadd.s32 %s18, %s19
      %s173 = smul.u32 2, %s172
      %p174 = scmp.lt.s32.totalorder %s173, 27
      %s175 = scalar_select %p174, %s173, 27
      %s176 = smul.addr %s175, 4
      %s177 = scalar_lea.vmem %s0, %s176
      %p178 = pneg %p49
      %p179 = pneg %p46
      %s180 = smul.u32 16, %s19
      %p181 = scmp.lt.s32.totalorder %s180, 111
      %s182 = scalar_select %p181, %s180, 111
      %s183 = smul.addr %s182, 2
      %s184 = smul.addr %s183, 4
      %s185 = scalar_lea.vmem %s1, %s184
      %p186 = pneg %p75
      %p187 = pneg %p72
      %p188 = pneg %p96
      %p189 = pneg %p93
      %p190 = pneg %p122
      %p191 = pneg %p119
      %s192 = smul.u32 2, %s18
      %p193 = scmp.lt.s32.totalorder %s192, 15
      %s194 = scalar_select %p193, %s192, 15
      %s195 = smul.addr %s194, 2
      %s196 = smul.addr %s195, 8
      %s197 = scalar_lea.vmem %s3, %s196
      %s198 = sadd.s32 %s18, %s19
      %s199 = smul.u32 2, %s198
      %p200 = scmp.lt.s32.totalorder %s199, 27
      %s201 = scalar_select %p200, %s199, 27
      %s202 = smul.addr %s201, 4
      %s203 = scalar_lea.vmem %s0, %s202
      %s204 = sadd.s32 %s18, %s19
      %s205 = smul.u32 2, %s204
      %s206 = smul.u32 16, %s19
      %p207 = scmp.lt.s32.totalorder %s206, 111
      %s208 = scalar_select %p207, %s206, 111
      %s209 = smul.addr %s208, 2
      %s210 = smul.addr %s209, 4
      %s211 = scalar_lea.vmem %s1, %s210
      %s212 = smul.u32 16, %s19
      %s213 = smul.u32 2, %s18
      %p214 = scmp.lt.s32.totalorder %s213, 15
      %s215 = scalar_select %p214, %s213, 15
      %s216 = smul.addr %s215, 2
      %s217 = smul.addr %s216, 8
      %s218 = scalar_lea.vmem %s3, %s217
      %s219 = smul.u32 2, %s18
      %p221 = scmp.eq.s32.totalorder %s19, 0
      // Predicated region
      $region33: #{_lambda_.10} parent=31 // pred_check
        %p222 = pneg %p221
      $region34: #{_lambda_.10} parent=31 // pred_check_branch
        %224 = sbr.rel (%p222) target = $region36
      $region35: #{_lambda_.10} parent=31 // pred_region
        %225 = vst [vmem:[#allocation2] sm:$0xff] 0.0
        %226 = vst [vmem:[#allocation2 + $0x8] sm:$0xff] 0.0
        %227 = vst [vmem:[#allocation2 + $0x10] sm:$0xff] 0.0
        %228 = vst [vmem:[#allocation2 + $0x18] sm:$0xff] 0.0
      $region36: #{_lambda_.10} parent=31 // pred_fallthru
        _
      %v229 = vld [vmem:[#allocation2] sm:$0xff]
      %v230 = vld [vmem:[#allocation2 + $0x8] sm:$0xff]
      %v231 = vld [vmem:[#allocation2 + $0x10] sm:$0xff]
      %v232 = vld [vmem:[#allocation2 + $0x18] sm:$0xff]
      %v233 = vld [vmem:[%s203] sm:$0xf]
      %v234 = vld [vmem:[%s203 + $0x4] sm:$0xf]
      %v235 = vld [vmem:[%s211] sm:$0xff]
      %v236 = vld [vmem:[%s211 + $0x8] sm:$0xff]
      %v237 = vld [vmem:[%s211 + $0x10] sm:$0xff]
      %v238 = vld [vmem:[%s211 + $0x18] sm:$0xff]
      %v239 = vld [vmem:[%s211 + $0x20] sm:$0xff]
      %v240 = vld [vmem:[%s211 + $0x28] sm:$0xff]
      %v241 = vld [vmem:[%s211 + $0x30] sm:$0xff]
      %v242 = vld [vmem:[%s211 + $0x38] sm:$0xff]
      %v243 = vld [vmem:[%s211 + $0x40] sm:$0xff]
      %v244 = vld [vmem:[%s211 + $0x48] sm:$0xff]
      %v245 = vld [vmem:[%s211 + $0x50] sm:$0xff]
      %v246 = vld [vmem:[%s211 + $0x58] sm:$0xff]
      %v247 = vld [vmem:[%s211 + $0x60] sm:$0xff]
      %v248 = vld [vmem:[%s211 + $0x68] sm:$0xff]
      %v249 = vld [vmem:[%s211 + $0x70] sm:$0xff]
      %v250 = vld [vmem:[%s211 + $0x78] sm:$0xff]
      %v253 = vunpack.c.l.b16 %v233
      %v254 = vunpack.c.l.b16 %v234
      %v255 = vpack.c.b16 %v254, %v253
      %v273 = vunpack.c.l.b16 %v235
      %v274 = vunpack.c.h.b16 %v235
      %v275 = vunpack.c.l.b16 %v236
      %v276 = vunpack.c.h.b16 %v236
      %v277 = vunpack.c.l.b16 %v237
      %v278 = vunpack.c.h.b16 %v237
      %v279 = vunpack.c.l.b16 %v238
      %v280 = vunpack.c.h.b16 %v238
      %v281 = vunpack.c.l.b16 %v239
      %v282 = vunpack.c.h.b16 %v239
      %v283 = vunpack.c.l.b16 %v240
      %v284 = vunpack.c.h.b16 %v240
      %v285 = vunpack.c.l.b16 %v241
      %v286 = vunpack.c.h.b16 %v241
      %v287 = vunpack.c.l.b16 %v242
      %v288 = vunpack.c.h.b16 %v242
      %v289 = vunpack.c.l.b16 %v243
      %v290 = vunpack.c.h.b16 %v243
      %v291 = vunpack.c.l.b16 %v244
      %v292 = vunpack.c.h.b16 %v244
      %v293 = vunpack.c.l.b16 %v245
      %v294 = vunpack.c.h.b16 %v245
      %v295 = vunpack.c.l.b16 %v246
      %v296 = vunpack.c.h.b16 %v246
      %v297 = vunpack.c.l.b16 %v247
      %v298 = vunpack.c.h.b16 %v247
      %v299 = vunpack.c.l.b16 %v248
      %v300 = vunpack.c.h.b16 %v248
      %v301 = vunpack.c.l.b16 %v249
      %v302 = vunpack.c.h.b16 %v249
      %v303 = vunpack.c.l.b16 %v250
      %v304 = vunpack.c.h.b16 %v250
      %v305 = vpack.c.b16 %v275, %v273
      %v306 = vpack.c.b16 %v276, %v274
      %v307 = vpack.c.b16 %v279, %v277
      %v308 = vpack.c.b16 %v280, %v278
      %v309 = vpack.c.b16 %v283, %v281
      %v310 = vpack.c.b16 %v284, %v282
      %v311 = vpack.c.b16 %v287, %v285
      %v312 = vpack.c.b16 %v288, %v286
      %v313 = vpack.c.b16 %v291, %v289
      %v314 = vpack.c.b16 %v292, %v290
      %v315 = vpack.c.b16 %v295, %v293
      %v316 = vpack.c.b16 %v296, %v294
      %v317 = vpack.c.b16 %v299, %v297
      %v318 = vpack.c.b16 %v300, %v298
      %v319 = vpack.c.b16 %v303, %v301
      %v320 = vpack.c.b16 %v304, %v302
      %337 = vmatprep.subr.bf16.mxu0 %v306
      %338 = vmatpush1.bf16.msra.mxu0 %v305
      %339 = vmatprep.subr.bf16.mxu0 %v308
      %340 = vmatpush1.bf16.msra.mxu0 %v307
      %341 = vmatprep.subr.bf16.mxu0 %v310
      %342 = vmatpush1.bf16.msra.mxu0 %v309
      %343 = vmatprep.subr.bf16.mxu0 %v312
      %344 = vmatpush1.bf16.msra.mxu0 %v311
      %345 = vmatprep.subr.bf16.mxu0 %v314
      %346 = vmatpush1.bf16.msra.mxu0 %v313
      %347 = vmatprep.subr.bf16.mxu0 %v316
      %348 = vmatpush1.bf16.msra.mxu0 %v315
      %349 = vmatprep.subr.bf16.mxu0 %v318
      %350 = vmatpush1.bf16.msra.mxu0 %v317
      %351 = vmatprep.subr.bf16.mxu0 %v320
      %352 = vmatpush1.bf16.msra.mxu0 %v319
      %353 = vmatprep.subr.bf16.mxu0 0
      %354 = vmatpush1.bf16.msra.mxu0 0
      %355 = vmatprep.subr.bf16.mxu0 0
      %356 = vmatpush1.bf16.msra.mxu0 0
      %357 = vmatprep.subr.bf16.mxu0 0
      %358 = vmatpush1.bf16.msra.mxu0 0
      %359 = vmatprep.subr.bf16.mxu0 0
      %360 = vmatpush1.bf16.msra.mxu0 0
      %361 = vmatprep.subr.bf16.mxu0 0
      %362 = vmatpush1.bf16.msra.mxu0 0
      %363 = vmatprep.subr.bf16.mxu0 0
      %364 = vmatpush1.bf16.msra.mxu0 0
      %365 = vmatprep.subr.bf16.mxu0 0
      %366 = vmatpush1.bf16.msra.mxu0 0
      %367 = vmatprep.subr.bf16.mxu0 0
      %368 = vmatpush1.bf16.msra.mxu0 0
      %369 = vmatprep.mubr.bf16.mxu0 0
      %370 = vmatmul.mubr.bf16.gmra.mrb[0].mxu0 %v255
      %v371 = vpop.f32.mrb[0].mxu0
      %v372 = vadd.f32 0.0, %v371
      %v373 = vpop.f32.mrb[0].mxu0
      %v374 = vadd.f32 0.0, %v373
      %v375 = vpop.f32.mrb[0].mxu0
      %v376 = vadd.f32 0.0, %v375
      %v377 = vpop.f32.mrb[0].mxu0
      %v378 = vadd.f32 0.0, %v377
      %379 = vdwg.mxu0
      %v380 = vadd.f32 %v229, %v372
      %v381 = vadd.f32 %v230, %v374
      %v382 = vadd.f32 %v231, %v376
      %v383 = vadd.f32 %v232, %v378
      %384 = vst [vmem:[#allocation2] sm:$0xff] %v380
      %385 = vst [vmem:[#allocation2 + $0x8] sm:$0xff] %v381
      %386 = vst [vmem:[#allocation2 + $0x10] sm:$0xff] %v382
      %387 = vst [vmem:[#allocation2 + $0x18] sm:$0xff] %v383
      %p388 = scmp.eq.s32.totalorder %s19, 6
      // Predicated region
      $region37: #{_lambda_.10} parent=31 // pred_check
        %p389 = pneg %p388
      $region38: #{_lambda_.10} parent=31 // pred_check_branch
        %391 = sbr.rel (%p389) target = $region40
      $region39: #{_lambda_.10} parent=31 // pred_region
        %v392 = vld [vmem:[#allocation2] sm:$0xff]
        %v393 = vld [vmem:[#allocation2 + $0x8] sm:$0xff]
        %v394 = vld [vmem:[#allocation2 + $0x10] sm:$0xff]
        %v395 = vld [vmem:[#allocation2 + $0x18] sm:$0xff]
        %v396 = vld [vmem:[%s2] sm:$0x3]
        %v398 = vlaneseq
        %v399 = vshrl.u32 %v398, 7
        %v400 = vsub.s32 0, %v399
        %v401 = vrot.slane %v396, %v400
        %v402 = vlaneseq
        %v403 = vshrl.u32 %v402, 7
        %v404 = vsub.s32 1, %v403
        %v405 = vrot.slane %v396, %v404
        %v408 = vadd.f32 %v392, %v401
        %v409 = vadd.f32 %v393, %v405
        %v410 = vadd.f32 %v394, %v401
        %v411 = vadd.f32 %v395, %v405
        %v412 = vmax.f32 %v408, 0.0
        %v413 = vmax.f32 %v409, 0.0
        %v414 = vmax.f32 %v410, 0.0
        %v415 = vmax.f32 %v411, 0.0
        %416 = vst [vmem:[%s218] sm:$0xff] %v412
        %417 = vst [vmem:[%s218 + $0x8] sm:$0xff] %v413
        %418 = vst [vmem:[%s218 + $0x10] sm:$0xff] %v414
        %419 = vst [vmem:[%s218 + $0x18] sm:$0xff] %v415
      $region40: #{_lambda_.10} parent=31 // pred_fallthru
        _
      %s420 = smul.u32 2, %s18
      %p421 = scmp.lt.s32.totalorder %s420, 15
      %s422 = scalar_select %p421, %s420, 15
      %s423 = smul.addr %s422, 2
      %s424 = smul.addr %s423, 8
      %s425 = scalar_lea.vmem %s3, %s424
      // Predicated region
      $region41: #{_lambda_.10} parent=31 // pred_check
        %p426 = pneg %p119
      $region42: #{_lambda_.10} parent=31 // pred_check_branch
        %428 = sbr.rel (%p426) target = $region44
      $region43: #{_lambda_.10} parent=31 // pred_region
        %s429 = smul.u32 2, %s18
      $region44: #{_lambda_.10} parent=31 // pred_fallthru
        _
    $region32: #{_lambda_.10} parent=5 // pred_fallthru
      _
    %p430 = scmp.le.s32.totalorder 2, %s9
    // Predicated region
    $region45: #{_lambda_.10} parent=5 // pred_check
      %p431 = pneg %p430
    $region46: #{_lambda_.10} parent=5 // pred_check_branch
      %433 = sbr.rel (%p431) target = $region48
    $region47: #{_lambda_.10} parent=5 // pred_region
      %s434 = ssub.s32 %s9, 2
      // Predicated region
      $region49: #{_lambda_.10} parent=47 // pred_check
        %p435 = pneg %p125
      $region50: #{_lambda_.10} parent=47 // pred_check_branch
        %437 = sbr.rel (%p435) target = $region52
      $region51: #{_lambda_.10} parent=47 // pred_region
        %s438 = smul.u32 2, %s20
        %p439 = scmp.lt.s32.totalorder %s438, 15
        %s440 = scalar_select %p439, %s438, 15
        %s441 = smul.addr %s440, 2
        %s442 = smul.addr %s441, 8
        %s443 = scalar_lea.vmem %s3, %s442
      $region52: #{_lambda_.10} parent=47 // pred_fallthru
        _
    $region48: #{_lambda_.10} parent=5 // pred_fallthru
      _
  $region6: #{_lambda_.10} parent=0 // loop_footer
    %s13 = sadd.s32 1, %s9
  $region7: #{_lambda_.10} parent=0 // loop_footer_branch
    %8 = sbr.rel target = $region3
  $region8: #{_lambda_.10} parent=0 // loop_exit
    _

</llo_original>
